<compile_context>
chip_gen: v6e
topology: v6e:2x2x1
jax: 0.10.0
libtpu: 0.0.40
codegen_flags: <defaults>
</compile_context>

<pallas_src>
import functools

import jax
import jax.numpy as jnp
from jax.experimental import pallas as pl
from jax.experimental.pallas import tpu as pltpu


LANE = 128                      # channel padding (lane width)
TM = 128                        # node row-block (output rows)
TK = 128                        # neighbor contraction block
TN = 128                        # output column block for P @ A_hat
G_SUB = 8                       # sublane padding for graph count
VMEM_LIMIT = 48 * 1024 * 1024   # explicit scoped-VMEM budget (fits v7x's 64 MiB)


def _round_up(x, m):
    return (x + m - 1) // m * m


# ----------------------------- Pallas kernels ------------------------------ #

def _xw_kernel(x_ref, w_ref, o_ref):
    """o = x @ w for one row block.  x:(TM,Fp) bf16, w:(Fp,Hp) bf16 -> bf16."""
    o_ref[...] = jnp.dot(x_ref[...], w_ref[...],
                         preferred_element_type=jnp.float32).astype(o_ref.dtype)


def _aggregate_kernel(a_ref, xw_ref, b_ref, o_ref, acc_ref, *, apply_relu):
    """o[i] = act(sum_k A[i,k] @ XW[k] + b), f32 accumulator, bf16 MXU."""
    k = pl.program_id(1)

    @pl.when(k == 0)
    def _():
        acc_ref[...] = jnp.zeros_like(acc_ref)

    acc_ref[...] += jnp.dot(a_ref[...], xw_ref[...],
                            preferred_element_type=jnp.float32)

    @pl.when(k == pl.num_programs(1) - 1)
    def _():
        h = acc_ref[...] + b_ref[...]          # bias only in finalize
        if apply_relu:
            h = jnp.maximum(h, 0.0)
        o_ref[...] = h.astype(o_ref.dtype)


def _pa_kernel(p_ref, a_ref, o_ref, acc_ref):
    """PA[:, j] = sum_k P[:, k] @ A[k, j]   (pool-weights times A_hat)."""
    k = pl.program_id(1)

    @pl.when(k == 0)
    def _():
        acc_ref[...] = jnp.zeros_like(acc_ref)

    acc_ref[...] += jnp.dot(p_ref[...], a_ref[...],
                            preferred_element_type=jnp.float32)

    @pl.when(k == pl.num_programs(1) - 1)
    def _():
        o_ref[...] = acc_ref[...].astype(o_ref.dtype)


def _pool_proj_kernel(pa_ref, h_ref, w_ref, b_ref, o_ref, acc_ref):
    """pooled = (sum_k PA[:,k] @ H[k]) @ W3 + b3_eff  (layer-3 + mean-pool)."""
    k = pl.program_id(0)

    @pl.when(k == 0)
    def _():
        acc_ref[...] = jnp.zeros_like(acc_ref)

    acc_ref[...] += jnp.dot(pa_ref[...], h_ref[...],
                            preferred_element_type=jnp.float32)

    @pl.when(k == pl.num_programs(0) - 1)
    def _():
        proj = jnp.dot(acc_ref[...].astype(jnp.bfloat16), w_ref[...],
                       preferred_element_type=jnp.float32)
        o_ref[...] = proj + b_ref[...]


# --------------------------- pallas_call wrappers --------------------------- #

def _xw(x_p, w_p):
    n_pad, f_pad = x_p.shape
    h_pad = w_p.shape[1]
    return pl.pallas_call(
        _xw_kernel,
        out_shape=jax.ShapeDtypeStruct((n_pad, h_pad), jnp.bfloat16),
        grid=(n_pad // TM,),
        in_specs=[pl.BlockSpec((TM, f_pad), lambda i: (i, 0)),
                  pl.BlockSpec((f_pad, h_pad), lambda i: (0, 0))],
        out_specs=pl.BlockSpec((TM, h_pad), lambda i: (i, 0)),
        compiler_params=pltpu.CompilerParams(
            dimension_semantics=("parallel",),
            vmem_limit_bytes=VMEM_LIMIT),
    )(x_p, w_p)


def _aggregate(a_p, xw_p, b_p, *, apply_relu):
    n_pad = a_p.shape[0]
    h_pad = xw_p.shape[1]
    kernel = functools.partial(_aggregate_kernel, apply_relu=apply_relu)
    return pl.pallas_call(
        kernel,
        out_shape=jax.ShapeDtypeStruct((n_pad, h_pad), jnp.bfloat16),
        grid=(n_pad // TM, n_pad // TK),
        in_specs=[pl.BlockSpec((TM, TK), lambda i, k: (i, k)),
                  pl.BlockSpec((TK, h_pad), lambda i, k: (k, 0)),
                  pl.BlockSpec((1, h_pad), lambda i, k: (0, 0))],
        out_specs=pl.BlockSpec((TM, h_pad), lambda i, k: (i, 0)),
        scratch_shapes=[pltpu.VMEM((TM, h_pad), jnp.float32)],
        compiler_params=pltpu.CompilerParams(
            dimension_semantics=("parallel", "arbitrary"),
            vmem_limit_bytes=VMEM_LIMIT),
    )(a_p, xw_p, b_p)


def _pool_adj(p_p, a_p):
    g_pad, n_pad = p_p.shape
    return pl.pallas_call(
        _pa_kernel,
        out_shape=jax.ShapeDtypeStruct((g_pad, n_pad), jnp.bfloat16),
        grid=(n_pad // TN, n_pad // TK),
        in_specs=[pl.BlockSpec((g_pad, TK), lambda j, k: (0, k)),
                  pl.BlockSpec((TK, TN), lambda j, k: (k, j))],
        out_specs=pl.BlockSpec((g_pad, TN), lambda j, k: (0, j)),
        scratch_shapes=[pltpu.VMEM((g_pad, TN), jnp.float32)],
        compiler_params=pltpu.CompilerParams(
            dimension_semantics=("parallel", "arbitrary"),
            vmem_limit_bytes=VMEM_LIMIT),
    )(p_p, a_p)


def _pool_proj(pa_p, h_p, w_p, b_p):
    g_pad, n_pad = pa_p.shape
    h_pad = h_p.shape[1]
    return pl.pallas_call(
        _pool_proj_kernel,
        out_shape=jax.ShapeDtypeStruct((g_pad, h_pad), jnp.float32),
        grid=(n_pad // TK,),
        in_specs=[pl.BlockSpec((g_pad, TK), lambda k: (0, k)),
                  pl.BlockSpec((TK, h_pad), lambda k: (k, 0)),
                  pl.BlockSpec((h_pad, h_pad), lambda k: (0, 0)),
                  pl.BlockSpec((g_pad, h_pad), lambda k: (0, 0))],
        out_specs=pl.BlockSpec((g_pad, h_pad), lambda k: (0, 0)),
        scratch_shapes=[pltpu.VMEM((g_pad, h_pad), jnp.float32)],
        compiler_params=pltpu.CompilerParams(
            dimension_semantics=("arbitrary",),
            vmem_limit_bytes=VMEM_LIMIT),
    )(pa_p, h_p, w_p, b_p)


# ------------------------------ JAX glue code ------------------------------- #

def build_norm_adj(edge_index, num_nodes):
    """Dense A_hat = D^{-1/2} (A + I) D^{-1/2}, matching PyG GCNConv defaults.

    Uses scatter-ADD so duplicate edges contribute multiple messages (PyG
    semantics), unlike a .set() which would collapse them.
    """
    src, dst = edge_index[0], edge_index[1]
    a = jnp.zeros((num_nodes, num_nodes), jnp.float32)
    a = a.at[dst, src].add(1.0)                       # message j -> i in row i
    a = a + jnp.eye(num_nodes, dtype=jnp.float32)     # add self loops
    deg = jnp.sum(a, axis=1)
    d_inv_sqrt = jnp.where(deg > 0, 1.0 / jnp.sqrt(deg), 0.0)
    return d_inv_sqrt[:, None] * a * d_inv_sqrt[None, :]


def build_mean_pool(batch, num_graphs, num_nodes):
    """(G, N) matrix whose row g averages nodes assigned to graph g."""
    onehot = (batch[None, :] == jnp.arange(num_graphs)[:, None]).astype(jnp.float32)
    counts = jnp.maximum(jnp.sum(onehot, axis=1, keepdims=True), 1.0)
    return onehot / counts


@functools.partial(jax.jit, static_argnames=("num_graphs",))
def gnn_forward(x, edge_index, batch, params, num_graphs):
    n, f = x.shape
    w1, b1, w2, b2, w3, b3 = params
    hidden = w1.shape[1]

    n_pad = _round_up(max(n, TM), TM)
    f_pad = _round_up(f, LANE)
    h_pad = _round_up(hidden, LANE)
    g_pad = _round_up(max(num_graphs, G_SUB), G_SUB)

    a_hat = build_norm_adj(edge_index, n)
    pool = build_mean_pool(batch, num_graphs, n)

    # Zero-padding is transparent: padded nodes have no edges and zero pool
    # weight, so they never contribute to real rows; padded channels are zero.
    a_p = jnp.zeros((n_pad, n_pad), jnp.bfloat16).at[:n, :n].set(
        a_hat.astype(jnp.bfloat16))
    x_p = jnp.zeros((n_pad, f_pad), jnp.bfloat16).at[:n, :f].set(
        x.astype(jnp.bfloat16))
    p_p = jnp.zeros((g_pad, n_pad), jnp.bfloat16).at[:num_graphs, :n].set(
        pool.astype(jnp.bfloat16))

    def pad_w(w):
        fi, fo = w.shape
        return jnp.zeros((_round_up(fi, LANE), _round_up(fo, LANE)),
                         jnp.bfloat16).at[:fi, :fo].set(w.astype(jnp.bfloat16))

    def pad_b(b):
        b2d = jnp.asarray(b, jnp.float32).reshape(1, -1)
        return jnp.zeros((1, h_pad), jnp.float32).at[:, :b2d.shape[1]].set(b2d)

    w1p, w2p, w3p = pad_w(w1), pad_w(w2), pad_w(w3)
    b1p, b2p = pad_b(b1), pad_b(b2)

    # Layer-3 bias after mean pooling: P @ (1_N b3) = rowsum(P) * b3  (exact,
    # and 0 for graphs with no nodes, matching the unfused computation).
    b3_eff = jnp.sum(pool, axis=1, keepdims=True) * jnp.asarray(
        b3, jnp.float32).reshape(1, -1)                       # (G, hidden)
    b3g = jnp.zeros((g_pad, h_pad), jnp.float32).at[
        :num_graphs, :hidden].set(b3_eff)

    # Layer 1: relu(A_hat @ (X @ W1) + b1)
    h1 = _aggregate(a_p, _xw(x_p, w1p), b1p, apply_relu=True)
    # Layer 2: relu(A_hat @ (h1 @ W2) + b2)  -> embeddings
    h2 = _aggregate(a_p, _xw(h1, w2p), b2p, apply_relu=True)

    # Layer 3 + global_mean_pool, fused algebraically:
    #   pooled = (P @ A_hat) @ h2 @ W3 + rowsum(P) * b3
    # (dropout p=0.5 in eval mode is identity).
    pa = _pool_adj(p_p, a_p)                    # (g_pad, n_pad) bf16
    pooled = _pool_proj(pa, h2, w3p, b3g)       # (g_pad, h_pad) f32

    out = pooled[:num_graphs, :hidden]
    emb = h2[:n, :hidden].astype(jnp.float32)
    return {"output": out, "embeddings": emb}


def init_params(key, num_node_features, hidden_channels):
    """Deterministic Glorot-style weights, zero biases (PyG GCNConv init)."""
    k1, k2, k3 = jax.random.split(key, 3)

    def glorot(k, fan_in, fan_out):
        limit = jnp.sqrt(6.0 / (fan_in + fan_out))
        return jax.random.uniform(k, (fan_in, fan_out), jnp.float32, -limit, limit)

    w1 = glorot(k1, num_node_features, hidden_channels)
    w2 = glorot(k2, hidden_channels, hidden_channels)
    w3 = glorot(k3, hidden_channels, hidden_channels)
    b1 = jnp.zeros((1, hidden_channels), jnp.float32)
    b2 = jnp.zeros((1, hidden_channels), jnp.float32)
    b3 = jnp.zeros((1, hidden_channels), jnp.float32)
    return (w1, b1, w2, b2, w3, b3)


# --------------------------------- main ------------------------------------ #

if __name__ == "__main__":
    key = jax.random.PRNGKey(0)
    k_x, k_e, k_p = jax.random.split(key, 3)

    num_nodes = 16
    num_node_features = 8
    hidden_channels = 32
    num_graphs = 2
    num_edges = 24

    # Node features.
    x = jax.random.normal(k_x, (num_nodes, num_node_features), jnp.float32)

    # Random undirected edge_index (2, 2*num_edges): each edge added both ways.
    src = jax.random.randint(k_e, (num_edges,), 0, num_nodes)
    dst = (src + 1 + jax.random.randint(k_p, (num_edges,), 0, num_nodes - 1)) % num_nodes
    edge_index = jnp.stack([jnp.concatenate([src, dst]),
                            jnp.concatenate([dst, src])], axis=0).astype(jnp.int32)

    # Batch assignment: first half of nodes -> graph 0, second half -> graph 1.
    batch = jnp.concatenate([jnp.zeros((num_nodes // 2,), jnp.int32),
                             jnp.ones((num_nodes - num_nodes // 2,), jnp.int32)])

    params = init_params(jax.random.PRNGKey(12345), num_node_features, hidden_channels)

    result = gnn_forward(x, edge_index, batch, params, num_graphs)
    jax.block_until_ready(result)

    assert result["output"].shape == (num_graphs, hidden_channels)
    assert result["embeddings"].shape == (num_nodes, hidden_channels)
    assert bool(jnp.all(jnp.isfinite(result["output"])))
    assert bool(jnp.all(jnp.isfinite(result["embeddings"])))
    print("KERNEL_OK")
</pallas_src>

<mosaic_0001>
module attributes {stable_mosaic.version = 11 : i64} {
  func.func private @main(%arg0: i32) attributes {dimension_semantics = [#tpu.dimension_semantics<core_parallel>], iteration_bounds = array<i64: 2>, tpu.core_type = #tpu.core_type<sc_scalar_subcore>, window_params = []} {
    return
  }
}

module attributes {stable_mosaic.version = 11 : i64} {
  func.func private @main(%arg0: i32) attributes {dimension_semantics = [#tpu.dimension_semantics<core_parallel>], iteration_bounds = array<i64: 2>, tpu.core_type = #tpu.core_type<sc_scalar_subcore>, window_params = []} {
    return
  }
}

module attributes {stable_mosaic.version = 11 : i64} {
  func.func @_pa_kernel(%arg0: i32, %arg1: i32, %arg2: memref<8x128xbf16, #tpu.memory_space<vmem>>, %arg3: memref<128x128xbf16, #tpu.memory_space<vmem>>, %arg4: memref<8x128xbf16, #tpu.memory_space<vmem>>, %arg5: memref<8x128xf32, #tpu.memory_space<vmem>>) attributes {dimension_semantics = [#tpu.dimension_semantics<parallel>, #tpu.dimension_semantics<arbitrary>], iteration_bounds = array<i64: 1, 1>, scalar_prefetch = 0 : i64, scratch_operands = 1 : i64, tpu.core_type = #tpu.core_type<tc>, window_params = [{transform_indices = @transform_0, window_bounds = array<i64: 8, 128>}, {transform_indices = @transform_1, window_bounds = array<i64: 128, 128>}, {transform_indices = @transform_2, window_bounds = array<i64: 8, 128>}]} {
    %c0_i32 = arith.constant 0 : i32
    %0 = arith.cmpi eq, %arg1, %c0_i32 : i32
    %1 = arith.extui %0 : i1 to i32
    %c0_i32_0 = arith.constant 0 : i32
    %2 = arith.cmpi ne, %1, %c0_i32_0 : i32
    scf.if %2 {
      %cst_10 = arith.constant 0.000000e+00 : f32
      %12 = vector.broadcast %cst_10 : f32 to vector<8x128xf32>
      %c0_11 = arith.constant 0 : index
      %c0_12 = arith.constant 0 : index
      %13 = vector.load %arg5[%c0_11, %c0_12] : memref<8x128xf32, #tpu.memory_space<vmem>>, vector<8x128xf32>
      tpu.vector_store %arg5[%c0_11, %c0_12], %12 {strides = array<i32>} : memref<8x128xf32, #tpu.memory_space<vmem>>, vector<8x128xf32>,
    } else {
    }
    %c0 = arith.constant 0 : index
    %c0_1 = arith.constant 0 : index
    %3 = vector.load %arg5[%c0, %c0_1] : memref<8x128xf32, #tpu.memory_space<vmem>>, vector<8x128xf32>
    %c0_2 = arith.constant 0 : index
    %c0_3 = arith.constant 0 : index
    %4 = vector.load %arg2[%c0_2, %c0_3] : memref<8x128xbf16, #tpu.memory_space<vmem>>, vector<8x128xbf16>
    %c0_4 = arith.constant 0 : index
    %c0_5 = arith.constant 0 : index
    %5 = vector.load %arg3[%c0_4, %c0_5] : memref<128x128xbf16, #tpu.memory_space<vmem>>, vector<128x128xbf16>
    %cst = arith.constant dense<0.000000e+00> : vector<8x128xf32>
    %6 = tpu.matmul %4, %5, %cst {dimension_numbers = #tpu.dot_dimension_numbers<[1], [0], [0], [1], [0, 0, 1, 1], [], []>} : vector<8x128xbf16>, vector<128x128xbf16>, vector<8x128xf32> -> vector<8x128xf32>
    %7 = arith.addf %3, %6 : vector<8x128xf32>
    %c0_6 = arith.constant 0 : index
    %c0_7 = arith.constant 0 : index
    %8 = vector.load %arg5[%c0_6, %c0_7] : memref<8x128xf32, #tpu.memory_space<vmem>>, vector<8x128xf32>
    tpu.vector_store %arg5[%c0_6, %c0_7], %7 {strides = array<i32>} : memref<8x128xf32, #tpu.memory_space<vmem>>, vector<8x128xf32>,
    %c0_i32_8 = arith.constant 0 : i32
    %9 = arith.cmpi eq, %arg1, %c0_i32_8 : i32
    %10 = arith.extui %9 : i1 to i32
    %c0_i32_9 = arith.constant 0 : i32
    %11 = arith.cmpi ne, %10, %c0_i32_9 : i32
    scf.if %11 {
      %c0_10 = arith.constant 0 : index
      %c0_11 = arith.constant 0 : index
      %12 = vector.load %arg5[%c0_10, %c0_11] : memref<8x128xf32, #tpu.memory_space<vmem>>, vector<8x128xf32>
      %13 = arith.truncf %12 : vector<8x128xf32> to vector<8x128xbf16>
      %c0_12 = arith.constant 0 : index
      %c0_13 = arith.constant 0 : index
      %14 = vector.load %arg4[%c0_12, %c0_13] : memref<8x128xbf16, #tpu.memory_space<vmem>>, vector<8x128xbf16>
      tpu.vector_store %arg4[%c0_12, %c0_13], %13 {strides = array<i32>} : memref<8x128xbf16, #tpu.memory_space<vmem>>, vector<8x128xbf16>,
    } else {
    }
    return
  }
  func.func @transform_0(%arg0: i32, %arg1: i32) -> (i32, i32) {
    %c0_i32 = arith.constant 0 : i32
    %c0_i32_0 = arith.constant 0 : i32
    return %c0_i32, %arg1 : i32, i32
  }
  func.func @transform_1(%arg0: i32, %arg1: i32) -> (i32, i32) {
    %c0_i32 = arith.constant 0 : i32
    return %arg1, %arg0 : i32, i32
  }
  func.func @transform_2(%arg0: i32, %arg1: i32) -> (i32, i32) {
    %c0_i32 = arith.constant 0 : i32
    %c0_i32_0 = arith.constant 0 : i32
    return %c0_i32, %arg0 : i32, i32
  }
}

module attributes {stable_mosaic.version = 11 : i64} {
  func.func @_aggregate_kernel(%arg0: i32, %arg1: i32, %arg2: memref<128x128xbf16, #tpu.memory_space<vmem>>, %arg3: memref<128x128xbf16, #tpu.memory_space<vmem>>, %arg4: memref<1x128xf32, #tpu.memory_space<vmem>>, %arg5: memref<128x128xbf16, #tpu.memory_space<vmem>>, %arg6: memref<128x128xf32, #tpu.memory_space<vmem>>) attributes {dimension_semantics = [#tpu.dimension_semantics<parallel>, #tpu.dimension_semantics<arbitrary>], iteration_bounds = array<i64: 1, 1>, scalar_prefetch = 0 : i64, scratch_operands = 1 : i64, tpu.core_type = #tpu.core_type<tc>, window_params = [{transform_indices = @transform_0, window_bounds = array<i64: 128, 128>}, {transform_indices = @transform_1, window_bounds = array<i64: 128, 128>}, {pipeline_mode = #tpu.pipeline_mode<synchronous>, transform_indices = @transform_2, window_bounds = array<i64: 1, 128>}, {transform_indices = @transform_3, window_bounds = array<i64: 128, 128>}]} {
    %c0_i32 = arith.constant 0 : i32
    %0 = arith.cmpi eq, %arg1, %c0_i32 : i32
    %1 = arith.extui %0 : i1 to i32
    %c0_i32_0 = arith.constant 0 : i32
    %2 = arith.cmpi ne, %1, %c0_i32_0 : i32
    scf.if %2 {
      %cst_10 = arith.constant 0.000000e+00 : f32
      %12 = vector.broadcast %cst_10 : f32 to vector<128x128xf32>
      %c0_11 = arith.constant 0 : index
      %c0_12 = arith.constant 0 : index
      %13 = vector.load %arg6[%c0_11, %c0_12] : memref<128x128xf32, #tpu.memory_space<vmem>>, vector<128x128xf32>
      tpu.vector_store %arg6[%c0_11, %c0_12], %12 {strides = array<i32>} : memref<128x128xf32, #tpu.memory_space<vmem>>, vector<128x128xf32>,
    } else {
    }
    %c0 = arith.constant 0 : index
    %c0_1 = arith.constant 0 : index
    %3 = vector.load %arg6[%c0, %c0_1] : memref<128x128xf32, #tpu.memory_space<vmem>>, vector<128x128xf32>
    %c0_2 = arith.constant 0 : index
    %c0_3 = arith.constant 0 : index
    %4 = vector.load %arg2[%c0_2, %c0_3] : memref<128x128xbf16, #tpu.memory_space<vmem>>, vector<128x128xbf16>
    %c0_4 = arith.constant 0 : index
    %c0_5 = arith.constant 0 : index
    %5 = vector.load %arg3[%c0_4, %c0_5] : memref<128x128xbf16, #tpu.memory_space<vmem>>, vector<128x128xbf16>
    %cst = arith.constant dense<0.000000e+00> : vector<128x128xf32>
    %6 = tpu.matmul %4, %5, %cst {dimension_numbers = #tpu.dot_dimension_numbers<[1], [0], [0], [1], [0, 0, 1, 1], [], []>} : vector<128x128xbf16>, vector<128x128xbf16>, vector<128x128xf32> -> vector<128x128xf32>
    %7 = arith.addf %3, %6 : vector<128x128xf32>
    %c0_6 = arith.constant 0 : index
    %c0_7 = arith.constant 0 : index
    %8 = vector.load %arg6[%c0_6, %c0_7] : memref<128x128xf32, #tpu.memory_space<vmem>>, vector<128x128xf32>
    tpu.vector_store %arg6[%c0_6, %c0_7], %7 {strides = array<i32>} : memref<128x128xf32, #tpu.memory_space<vmem>>, vector<128x128xf32>,
    %c0_i32_8 = arith.constant 0 : i32
    %9 = arith.cmpi eq, %arg1, %c0_i32_8 : i32
    %10 = arith.extui %9 : i1 to i32
    %c0_i32_9 = arith.constant 0 : i32
    %11 = arith.cmpi ne, %10, %c0_i32_9 : i32
    scf.if %11 {
      %c0_10 = arith.constant 0 : index
      %c0_11 = arith.constant 0 : index
      %12 = vector.load %arg6[%c0_10, %c0_11] : memref<128x128xf32, #tpu.memory_space<vmem>>, vector<128x128xf32>
      %c0_12 = arith.constant 0 : index
      %c0_13 = arith.constant 0 : index
      %13 = vector.load %arg4[%c0_12, %c0_13] : memref<1x128xf32, #tpu.memory_space<vmem>>, vector<1x128xf32>
      %14 = vector.broadcast %13 : vector<1x128xf32> to vector<128x128xf32>
      %15 = arith.addf %12, %14 : vector<128x128xf32>
      %cst_14 = arith.constant 0.000000e+00 : f32
      %16 = vector.broadcast %cst_14 : f32 to vector<128x128xf32>
      %17 = arith.maximumf %15, %16 : vector<128x128xf32>
      %18 = arith.truncf %17 : vector<128x128xf32> to vector<128x128xbf16>
      %c0_15 = arith.constant 0 : index
      %c0_16 = arith.constant 0 : index
      %19 = vector.load %arg5[%c0_15, %c0_16] : memref<128x128xbf16, #tpu.memory_space<vmem>>, vector<128x128xbf16>
      tpu.vector_store %arg5[%c0_15, %c0_16], %18 {strides = array<i32>} : memref<128x128xbf16, #tpu.memory_space<vmem>>, vector<128x128xbf16>,
    } else {
    }
    return
  }
  func.func @transform_0(%arg0: i32, %arg1: i32) -> (i32, i32) {
    %c0_i32 = arith.constant 0 : i32
    return %arg0, %arg1 : i32, i32
  }
  func.func @transform_1(%arg0: i32, %arg1: i32) -> (i32, i32) {
    %c0_i32 = arith.constant 0 : i32
    %c0_i32_0 = arith.constant 0 : i32
    return %arg1, %c0_i32 : i32, i32
  }
  func.func @transform_2(%arg0: i32, %arg1: i32) -> (i32, i32) {
    %c0_i32 = arith.constant 0 : i32
    %c0_i32_0 = arith.constant 0 : i32
    %c0_i32_1 = arith.constant 0 : i32
    return %c0_i32, %c0_i32_0 : i32, i32
  }
  func.func @transform_3(%arg0: i32, %arg1: i32) -> (i32, i32) {
    %c0_i32 = arith.constant 0 : i32
    %c0_i32_0 = arith.constant 0 : i32
    return %arg0, %c0_i32 : i32, i32
  }
}

module attributes {stable_mosaic.version = 11 : i64} {
  func.func @_xw_kernel(%arg0: i32, %arg1: memref<128x128xbf16, #tpu.memory_space<vmem>>, %arg2: memref<128x128xbf16, #tpu.memory_space<vmem>>, %arg3: memref<128x128xbf16, #tpu.memory_space<vmem>>) attributes {dimension_semantics = [#tpu.dimension_semantics<parallel>], iteration_bounds = array<i64: 1>, scalar_prefetch = 0 : i64, scratch_operands = 0 : i64, tpu.core_type = #tpu.core_type<tc>, window_params = [{transform_indices = @transform_0, window_bounds = array<i64: 128, 128>}, {pipeline_mode = #tpu.pipeline_mode<synchronous>, transform_indices = @transform_1, window_bounds = array<i64: 128, 128>}, {transform_indices = @transform_2, window_bounds = array<i64: 128, 128>}]} {
    %c0 = arith.constant 0 : index
    %c0_0 = arith.constant 0 : index
    %0 = vector.load %arg1[%c0, %c0_0] : memref<128x128xbf16, #tpu.memory_space<vmem>>, vector<128x128xbf16>
    %c0_1 = arith.constant 0 : index
    %c0_2 = arith.constant 0 : index
    %1 = vector.load %arg2[%c0_1, %c0_2] : memref<128x128xbf16, #tpu.memory_space<vmem>>, vector<128x128xbf16>
    %cst = arith.constant dense<0.000000e+00> : vector<128x128xf32>
    %2 = tpu.matmul %0, %1, %cst {dimension_numbers = #tpu.dot_dimension_numbers<[1], [0], [0], [1], [0, 0, 1, 1], [], []>} : vector<128x128xbf16>, vector<128x128xbf16>, vector<128x128xf32> -> vector<128x128xf32>
    %3 = arith.truncf %2 : vector<128x128xf32> to vector<128x128xbf16>
    %c0_3 = arith.constant 0 : index
    %c0_4 = arith.constant 0 : index
    %4 = vector.load %arg3[%c0_3, %c0_4] : memref<128x128xbf16, #tpu.memory_space<vmem>>, vector<128x128xbf16>
    tpu.vector_store %arg3[%c0_3, %c0_4], %3 {strides = array<i32>} : memref<128x128xbf16, #tpu.memory_space<vmem>>, vector<128x128xbf16>,
    return
  }
  func.func @transform_0(%arg0: i32) -> (i32, i32) {
    %c0_i32 = arith.constant 0 : i32
    %c0_i32_0 = arith.constant 0 : i32
    return %arg0, %c0_i32 : i32, i32
  }
  func.func @transform_1(%arg0: i32) -> (i32, i32) {
    %c0_i32 = arith.constant 0 : i32
    %c0_i32_0 = arith.constant 0 : i32
    %c0_i32_1 = arith.constant 0 : i32
    return %c0_i32, %c0_i32_0 : i32, i32
  }
  func.func @transform_2(%arg0: i32) -> (i32, i32) {
    %c0_i32 = arith.constant 0 : i32
    %c0_i32_0 = arith.constant 0 : i32
    return %arg0, %c0_i32 : i32, i32
  }
}

module attributes {stable_mosaic.version = 11 : i64} {
  func.func @_pool_proj_kernel(%arg0: i32, %arg1: memref<8x128xbf16, #tpu.memory_space<vmem>>, %arg2: memref<128x128xbf16, #tpu.memory_space<vmem>>, %arg3: memref<128x128xbf16, #tpu.memory_space<vmem>>, %arg4: memref<8x128xf32, #tpu.memory_space<vmem>>, %arg5: memref<8x128xf32, #tpu.memory_space<vmem>>, %arg6: memref<8x128xf32, #tpu.memory_space<vmem>>) attributes {dimension_semantics = [#tpu.dimension_semantics<arbitrary>], iteration_bounds = array<i64: 1>, scalar_prefetch = 0 : i64, scratch_operands = 1 : i64, tpu.core_type = #tpu.core_type<tc>, window_params = [{transform_indices = @transform_0, window_bounds = array<i64: 8, 128>}, {transform_indices = @transform_1, window_bounds = array<i64: 128, 128>}, {pipeline_mode = #tpu.pipeline_mode<synchronous>, transform_indices = @transform_2, window_bounds = array<i64: 128, 128>}, {pipeline_mode = #tpu.pipeline_mode<synchronous>, transform_indices = @transform_3, window_bounds = array<i64: 8, 128>}, {pipeline_mode = #tpu.pipeline_mode<synchronous>, transform_indices = @transform_4, window_bounds = array<i64: 8, 128>}]} {
    %c0_i32 = arith.constant 0 : i32
    %0 = arith.cmpi eq, %arg0, %c0_i32 : i32
    %1 = arith.extui %0 : i1 to i32
    %c0_i32_0 = arith.constant 0 : i32
    %2 = arith.cmpi ne, %1, %c0_i32_0 : i32
    scf.if %2 {
      %cst_10 = arith.constant 0.000000e+00 : f32
      %12 = vector.broadcast %cst_10 : f32 to vector<8x128xf32>
      %c0_11 = arith.constant 0 : index
      %c0_12 = arith.constant 0 : index
      %13 = vector.load %arg6[%c0_11, %c0_12] : memref<8x128xf32, #tpu.memory_space<vmem>>, vector<8x128xf32>
      tpu.vector_store %arg6[%c0_11, %c0_12], %12 {strides = array<i32>} : memref<8x128xf32, #tpu.memory_space<vmem>>, vector<8x128xf32>,
    } else {
    }
    %c0 = arith.constant 0 : index
    %c0_1 = arith.constant 0 : index
    %3 = vector.load %arg6[%c0, %c0_1] : memref<8x128xf32, #tpu.memory_space<vmem>>, vector<8x128xf32>
    %c0_2 = arith.constant 0 : index
    %c0_3 = arith.constant 0 : index
    %4 = vector.load %arg1[%c0_2, %c0_3] : memref<8x128xbf16, #tpu.memory_space<vmem>>, vector<8x128xbf16>
    %c0_4 = arith.constant 0 : index
    %c0_5 = arith.constant 0 : index
    %5 = vector.load %arg2[%c0_4, %c0_5] : memref<128x128xbf16, #tpu.memory_space<vmem>>, vector<128x128xbf16>
    %cst = arith.constant dense<0.000000e+00> : vector<8x128xf32>
    %6 = tpu.matmul %4, %5, %cst {dimension_numbers = #tpu.dot_dimension_numbers<[1], [0], [0], [1], [0, 0, 1, 1], [], []>} : vector<8x128xbf16>, vector<128x128xbf16>, vector<8x128xf32> -> vector<8x128xf32>
    %7 = arith.addf %3, %6 : vector<8x128xf32>
    %c0_6 = arith.constant 0 : index
    %c0_7 = arith.constant 0 : index
    %8 = vector.load %arg6[%c0_6, %c0_7] : memref<8x128xf32, #tpu.memory_space<vmem>>, vector<8x128xf32>
    tpu.vector_store %arg6[%c0_6, %c0_7], %7 {strides = array<i32>} : memref<8x128xf32, #tpu.memory_space<vmem>>, vector<8x128xf32>,
    %c0_i32_8 = arith.constant 0 : i32
    %9 = arith.cmpi eq, %arg0, %c0_i32_8 : i32
    %10 = arith.extui %9 : i1 to i32
    %c0_i32_9 = arith.constant 0 : i32
    %11 = arith.cmpi ne, %10, %c0_i32_9 : i32
    scf.if %11 {
      %c0_10 = arith.constant 0 : index
      %c0_11 = arith.constant 0 : index
      %12 = vector.load %arg6[%c0_10, %c0_11] : memref<8x128xf32, #tpu.memory_space<vmem>>, vector<8x128xf32>
      %13 = arith.truncf %12 : vector<8x128xf32> to vector<8x128xbf16>
      %c0_12 = arith.constant 0 : index
      %c0_13 = arith.constant 0 : index
      %14 = vector.load %arg3[%c0_12, %c0_13] : memref<128x128xbf16, #tpu.memory_space<vmem>>, vector<128x128xbf16>
      %cst_14 = arith.constant dense<0.000000e+00> : vector<8x128xf32>
      %15 = tpu.matmul %13, %14, %cst_14 {dimension_numbers = #tpu.dot_dimension_numbers<[1], [0], [0], [1], [0, 0, 1, 1], [], []>} : vector<8x128xbf16>, vector<128x128xbf16>, vector<8x128xf32> -> vector<8x128xf32>
      %c0_15 = arith.constant 0 : index
      %c0_16 = arith.constant 0 : index
      %16 = vector.load %arg4[%c0_15, %c0_16] : memref<8x128xf32, #tpu.memory_space<vmem>>, vector<8x128xf32>
      %17 = arith.addf %15, %16 : vector<8x128xf32>
      %c0_17 = arith.constant 0 : index
      %c0_18 = arith.constant 0 : index
      %18 = vector.load %arg5[%c0_17, %c0_18] : memref<8x128xf32, #tpu.memory_space<vmem>>, vector<8x128xf32>
      tpu.vector_store %arg5[%c0_17, %c0_18], %17 {strides = array<i32>} : memref<8x128xf32, #tpu.memory_space<vmem>>, vector<8x128xf32>,
    } else {
    }
    return
  }
  func.func @transform_0(%arg0: i32) -> (i32, i32) {
    %c0_i32 = arith.constant 0 : i32
    %c0_i32_0 = arith.constant 0 : i32
    return %c0_i32, %arg0 : i32, i32
  }
  func.func @transform_1(%arg0: i32) -> (i32, i32) {
    %c0_i32 = arith.constant 0 : i32
    %c0_i32_0 = arith.constant 0 : i32
    return %arg0, %c0_i32 : i32, i32
  }
  func.func @transform_2(%arg0: i32) -> (i32, i32) {
    %c0_i32 = arith.constant 0 : i32
    %c0_i32_0 = arith.constant 0 : i32
    %c0_i32_1 = arith.constant 0 : i32
    return %c0_i32, %c0_i32_0 : i32, i32
  }
  func.func @transform_3(%arg0: i32) -> (i32, i32) {
    %c0_i32 = arith.constant 0 : i32
    %c0_i32_0 = arith.constant 0 : i32
    %c0_i32_1 = arith.constant 0 : i32
    return %c0_i32, %c0_i32_0 : i32, i32
  }
  func.func @transform_4(%arg0: i32) -> (i32, i32) {
    %c0_i32 = arith.constant 0 : i32
    %c0_i32_0 = arith.constant 0 : i32
    %c0_i32_1 = arith.constant 0 : i32
    return %c0_i32, %c0_i32_0 : i32, i32
  }
}

</mosaic_0001>

<llo_original>
// kernel: gnn_forward.10
$region0: #{gnn_forward.10}
  #allocation0 [shape = 'u32[]', space=smem, size = 0x4, offset = 0x4, fixed_abs, tag = 'smem constant byte address 0x4 - core index']
  #allocation1 [shape = 'u32[144,128]{1,0:T(1,128)}', space=vmem, size = 0x12000, scoped, tag = 'internal scratch']
  #allocation2 [shape = 'f32[8,128]{1,0:T(8,128)}', space=vmem, size = 0x1000, scoped, tag = 'scratch operand']
  %s0 = inlined_call_operand.vmem [shape: bf16[8,128], index: 0, kind: input, shape index: {}]
  %s1 = inlined_call_operand.vmem [shape: bf16[128,128], index: 1, kind: input, shape index: {}]
  %s2 = inlined_call_operand.vmem [shape: bf16[8,128], index: 2, kind: output, shape index: {}]
  %s3 = sld [smem:[#allocation0]]
  $region26: #{gnn_forward.10} parent=0
    _
  %s5 = ssub.s32 1, %s3
  %s6 = scalar_select 0, %s5, %s3
  // Predicated region
  $region2: #{gnn_forward.10} parent=0 // pred_check
    _
  $region3: #{gnn_forward.10} parent=0 // pred_check_branch
    %8 = sbr.rel (0) target = $region5
  $region4: #{gnn_forward.10} parent=0 // pred_region
    _
  $region5: #{gnn_forward.10} parent=0 // pred_fallthru
    _
  // Predicated region
  $region6: #{gnn_forward.10} parent=0 // pred_check
    _
  $region7: #{gnn_forward.10} parent=0 // pred_check_branch
    %10 = sbr.rel (0) target = $region9
  $region8: #{gnn_forward.10} parent=0 // pred_region
    _
  $region9: #{gnn_forward.10} parent=0 // pred_fallthru
    _
  %p12 = scmp.eq.s32.totalorder 0, 0
  // Predicated region
  $region10: #{gnn_forward.10} parent=0 // pred_check
    %p13 = pneg %p12
  $region11: #{gnn_forward.10} parent=0 // pred_check_branch
    %15 = sbr.rel (%p13) target = $region13
  $region12: #{gnn_forward.10} parent=0 // pred_region
    %16 = vst [vmem:[#allocation2] sm:$0xff] 0.0
  $region13: #{gnn_forward.10} parent=0 // pred_fallthru
    _
  %v17 = vld [vmem:[#allocation2] sm:$0xff]
  %v18 = vld [vmem:[%s0] sm:$0xf]
  %v19 = vld [vmem:[%s1] sm:$0xf]
  %v20 = vld [vmem:[%s1 + $0x4] sm:$0xf]
  %v21 = vld [vmem:[%s1 + $0x8] sm:$0xf]
  %v22 = vld [vmem:[%s1 + $0xc] sm:$0xf]
  %v23 = vld [vmem:[%s1 + $0x10] sm:$0xf]
  %v24 = vld [vmem:[%s1 + $0x14] sm:$0xf]
  %v25 = vld [vmem:[%s1 + $0x18] sm:$0xf]
  %v26 = vld [vmem:[%s1 + $0x1c] sm:$0xf]
  %v27 = vld [vmem:[%s1 + $0x20] sm:$0xf]
  %v28 = vld [vmem:[%s1 + $0x24] sm:$0xf]
  %v29 = vld [vmem:[%s1 + $0x28] sm:$0xf]
  %v30 = vld [vmem:[%s1 + $0x2c] sm:$0xf]
  %v31 = vld [vmem:[%s1 + $0x30] sm:$0xf]
  %v32 = vld [vmem:[%s1 + $0x34] sm:$0xf]
  %v33 = vld [vmem:[%s1 + $0x38] sm:$0xf]
  %v34 = vld [vmem:[%s1 + $0x3c] sm:$0xf]
  %v51 = vunpack.c.l.b16 %v19
  %v52 = vunpack.c.l.b16 %v20
  %v53 = vunpack.c.l.b16 %v21
  %v54 = vunpack.c.l.b16 %v22
  %v55 = vunpack.c.l.b16 %v23
  %v56 = vunpack.c.l.b16 %v24
  %v57 = vunpack.c.l.b16 %v25
  %v58 = vunpack.c.l.b16 %v26
  %v59 = vunpack.c.l.b16 %v27
  %v60 = vunpack.c.l.b16 %v28
  %v61 = vunpack.c.l.b16 %v29
  %v62 = vunpack.c.l.b16 %v30
  %v63 = vunpack.c.l.b16 %v31
  %v64 = vunpack.c.l.b16 %v32
  %v65 = vunpack.c.l.b16 %v33
  %v66 = vunpack.c.l.b16 %v34
  %v67 = vpack.c.b16 %v52, %v51
  %v68 = vpack.c.b16 %v54, %v53
  %v69 = vpack.c.b16 %v56, %v55
  %v70 = vpack.c.b16 %v58, %v57
  %v71 = vpack.c.b16 %v60, %v59
  %v72 = vpack.c.b16 %v62, %v61
  %v73 = vpack.c.b16 %v64, %v63
  %v74 = vpack.c.b16 %v66, %v65
  %83 = vmatprep.subr.bf16.mxu0 0
  %84 = vmatpush1.bf16.msra.mxu0 %v74
  %85 = vmatprep.subr.bf16.mxu0 0
  %86 = vmatpush1.bf16.msra.mxu0 %v73
  %87 = vmatprep.subr.bf16.mxu0 0
  %88 = vmatpush1.bf16.msra.mxu0 %v72
  %89 = vmatprep.subr.bf16.mxu0 0
  %90 = vmatpush1.bf16.msra.mxu0 %v71
  %91 = vmatprep.subr.bf16.mxu0 0
  %92 = vmatpush1.bf16.msra.mxu0 %v70
  %93 = vmatprep.subr.bf16.mxu0 0
  %94 = vmatpush1.bf16.msra.mxu0 %v69
  %95 = vmatprep.subr.bf16.mxu0 0
  %96 = vmatpush1.bf16.msra.mxu0 %v68
  %97 = vmatprep.subr.bf16.mxu0 0
  %98 = vmatpush1.bf16.msra.mxu0 %v67
  %99 = vmatprep.subr.bf16.mxu0 0
  %100 = vmatpush2.bf16.msra.mxu0 0
  %101 = vmatprep.subr.bf16.mxu0 0
  %102 = vmatpush2.bf16.msra.mxu0 0
  %103 = vmatprep.subr.bf16.mxu0 0
  %104 = vmatpush2.bf16.msra.mxu0 0
  %105 = vmatprep.subr.bf16.mxu0 0
  %106 = vmatpush2.bf16.msra.mxu0 0
  %107 = vmatprep.subr.bf16.mxu0 0
  %108 = vmatpush2.bf16.msra.mxu0 0
  %109 = vmatprep.subr.bf16.mxu0 0
  %110 = vmatpush2.bf16.msra.mxu0 0
  %111 = vmatprep.subr.bf16.mxu0 0
  %112 = vmatpush2.bf16.msra.mxu0 0
  %113 = vmatprep.subr.bf16.mxu0 0
  %114 = vmatpush2.bf16.msra.mxu0 0
  %115 = vmatprep.mubr.bf16.mxu0 0
  %116 = vmatmul.mubr.bf16.gmra.mxu0 %v18
  %v117 = vpop.f32.mrf.mxu0
  %v118 = vadd.f32 0.0, %v117
  %v119 = vpop.f32.mrf.mxu0
  %v120 = vpop.f32.mrf.mxu0
  %v121 = vpop.f32.mrf.mxu0
  %122 = vdwg.mxu0
  %v123 = vadd.f32 %v17, %v118
  %124 = vst [vmem:[#allocation2] sm:$0xff] %v123
  // Predicated region
  $region14: #{gnn_forward.10} parent=0 // pred_check
    %p125 = pneg %p12
  $region15: #{gnn_forward.10} parent=0 // pred_check_branch
    %127 = sbr.rel (%p125) target = $region17
  $region16: #{gnn_forward.10} parent=0 // pred_region
    %v128 = vld [vmem:[#allocation2] sm:$0xff]
    %v129 = vpack.c.bf16 %v128, %v128
    %130 = vst [vmem:[%s2] sm:$0xf] %v129
  $region17: #{gnn_forward.10} parent=0 // pred_fallthru
    _
  // Predicated region
  $region18: #{gnn_forward.10} parent=0 // pred_check
    _
  $region19: #{gnn_forward.10} parent=0 // pred_check_branch
    %132 = sbr.rel (0) target = $region21
  $region20: #{gnn_forward.10} parent=0 // pred_region
    _
  $region21: #{gnn_forward.10} parent=0 // pred_fallthru
    _
  // Predicated region
  $region22: #{gnn_forward.10} parent=0 // pred_check
    _
  $region23: #{gnn_forward.10} parent=0 // pred_check_branch
    %134 = sbr.rel (0) target = $region25
  $region24: #{gnn_forward.10} parent=0 // pred_region
    _
  $region25: #{gnn_forward.10} parent=0 // pred_fallthru
    _

// kernel: gnn_forward.11
$region0: #{gnn_forward.11}
  #allocation0 [shape = 'u32[]', space=smem, size = 0x4, offset = 0x4, fixed_abs, tag = 'smem constant byte address 0x4 - core index']
  #allocation1 [shape = 'u32[144,128]{1,0:T(1,128)}', space=vmem, size = 0x12000, scoped, tag = 'internal scratch']
  #allocation2 [shape = 'f32[8,128]{1,0:T(8,128)}', space=vmem, size = 0x1000, scoped, tag = 'scratch operand']
  %s0 = inlined_call_operand.vmem [shape: bf16[8,128], index: 0, kind: input, shape index: {}]
  %s1 = inlined_call_operand.vmem [shape: bf16[128,128], index: 1, kind: input, shape index: {}]
  %s2 = inlined_call_operand.vmem [shape: bf16[128,128], index: 2, kind: input, shape index: {}]
  %s3 = inlined_call_operand.vmem [shape: f32[8,128], index: 3, kind: input, shape index: {}]
  %s4 = inlined_call_operand.vmem [shape: f32[8,128], index: 4, kind: output, shape index: {}]
  %s5 = sld [smem:[#allocation0]]
  $region34: #{gnn_forward.11} parent=0
    _
  %s7 = ssub.s32 1, %s5
  %s8 = scalar_select 0, %s7, %s5
  // Predicated region
  $region2: #{gnn_forward.11} parent=0 // pred_check
    _
  $region3: #{gnn_forward.11} parent=0 // pred_check_branch
    %10 = sbr.rel (0) target = $region5
  $region4: #{gnn_forward.11} parent=0 // pred_region
    _
  $region5: #{gnn_forward.11} parent=0 // pred_fallthru
    _
  // Predicated region
  $region6: #{gnn_forward.11} parent=0 // pred_check
    _
  $region7: #{gnn_forward.11} parent=0 // pred_check_branch
    %12 = sbr.rel (0) target = $region9
  $region8: #{gnn_forward.11} parent=0 // pred_region
    _
  $region9: #{gnn_forward.11} parent=0 // pred_fallthru
    _
  // Predicated region
  $region10: #{gnn_forward.11} parent=0 // pred_check
    _
  $region11: #{gnn_forward.11} parent=0 // pred_check_branch
    %14 = sbr.rel (0) target = $region13
  $region12: #{gnn_forward.11} parent=0 // pred_region
    _
  $region13: #{gnn_forward.11} parent=0 // pred_fallthru
    _
  // Predicated region
  $region14: #{gnn_forward.11} parent=0 // pred_check
    _
  $region15: #{gnn_forward.11} parent=0 // pred_check_branch
    %16 = sbr.rel (0) target = $region17
  $region16: #{gnn_forward.11} parent=0 // pred_region
    _
  $region17: #{gnn_forward.11} parent=0 // pred_fallthru
    _
  %p18 = scmp.eq.s32.totalorder 0, 0
  // Predicated region
  $region18: #{gnn_forward.11} parent=0 // pred_check
    %p19 = pneg %p18
  $region19: #{gnn_forward.11} parent=0 // pred_check_branch
    %21 = sbr.rel (%p19) target = $region21
  $region20: #{gnn_forward.11} parent=0 // pred_region
    %22 = vst [vmem:[#allocation2] sm:$0xff] 0.0
  $region21: #{gnn_forward.11} parent=0 // pred_fallthru
    _
  %v23 = vld [vmem:[#allocation2] sm:$0xff]
  %v24 = vld [vmem:[%s0] sm:$0xf]
  %v25 = vld [vmem:[%s1] sm:$0xf]
  %v26 = vld [vmem:[%s1 + $0x4] sm:$0xf]
  %v27 = vld [vmem:[%s1 + $0x8] sm:$0xf]
  %v28 = vld [vmem:[%s1 + $0xc] sm:$0xf]
  %v29 = vld [vmem:[%s1 + $0x10] sm:$0xf]
  %v30 = vld [vmem:[%s1 + $0x14] sm:$0xf]
  %v31 = vld [vmem:[%s1 + $0x18] sm:$0xf]
  %v32 = vld [vmem:[%s1 + $0x1c] sm:$0xf]
  %v33 = vld [vmem:[%s1 + $0x20] sm:$0xf]
  %v34 = vld [vmem:[%s1 + $0x24] sm:$0xf]
  %v35 = vld [vmem:[%s1 + $0x28] sm:$0xf]
  %v36 = vld [vmem:[%s1 + $0x2c] sm:$0xf]
  %v37 = vld [vmem:[%s1 + $0x30] sm:$0xf]
  %v38 = vld [vmem:[%s1 + $0x34] sm:$0xf]
  %v39 = vld [vmem:[%s1 + $0x38] sm:$0xf]
  %v40 = vld [vmem:[%s1 + $0x3c] sm:$0xf]
  %v57 = vunpack.c.l.b16 %v25
  %v58 = vunpack.c.l.b16 %v26
  %v59 = vunpack.c.l.b16 %v27
  %v60 = vunpack.c.l.b16 %v28
  %v61 = vunpack.c.l.b16 %v29
  %v62 = vunpack.c.l.b16 %v30
  %v63 = vunpack.c.l.b16 %v31
  %v64 = vunpack.c.l.b16 %v32
  %v65 = vunpack.c.l.b16 %v33
  %v66 = vunpack.c.l.b16 %v34
  %v67 = vunpack.c.l.b16 %v35
  %v68 = vunpack.c.l.b16 %v36
  %v69 = vunpack.c.l.b16 %v37
  %v70 = vunpack.c.l.b16 %v38
  %v71 = vunpack.c.l.b16 %v39
  %v72 = vunpack.c.l.b16 %v40
  %v73 = vpack.c.b16 %v58, %v57
  %v74 = vpack.c.b16 %v60, %v59
  %v75 = vpack.c.b16 %v62, %v61
  %v76 = vpack.c.b16 %v64, %v63
  %v77 = vpack.c.b16 %v66, %v65
  %v78 = vpack.c.b16 %v68, %v67
  %v79 = vpack.c.b16 %v70, %v69
  %v80 = vpack.c.b16 %v72, %v71
  %89 = vmatprep.subr.bf16.mxu0 0
  %90 = vmatpush1.bf16.msra.mxu0 %v80
  %91 = vmatprep.subr.bf16.mxu0 0
  %92 = vmatpush1.bf16.msra.mxu0 %v79
  %93 = vmatprep.subr.bf16.mxu0 0
  %94 = vmatpush1.bf16.msra.mxu0 %v78
  %95 = vmatprep.subr.bf16.mxu0 0
  %96 = vmatpush1.bf16.msra.mxu0 %v77
  %97 = vmatprep.subr.bf16.mxu0 0
  %98 = vmatpush1.bf16.msra.mxu0 %v76
  %99 = vmatprep.subr.bf16.mxu0 0
  %100 = vmatpush1.bf16.msra.mxu0 %v75
  %101 = vmatprep.subr.bf16.mxu0 0
  %102 = vmatpush1.bf16.msra.mxu0 %v74
  %103 = vmatprep.subr.bf16.mxu0 0
  %104 = vmatpush1.bf16.msra.mxu0 %v73
  %105 = vmatprep.subr.bf16.mxu0 0
  %106 = vmatpush2.bf16.msra.mxu0 0
  %107 = vmatprep.subr.bf16.mxu0 0
  %108 = vmatpush2.bf16.msra.mxu0 0
  %109 = vmatprep.subr.bf16.mxu0 0
  %110 = vmatpush2.bf16.msra.mxu0 0
  %111 = vmatprep.subr.bf16.mxu0 0
  %112 = vmatpush2.bf16.msra.mxu0 0
  %113 = vmatprep.subr.bf16.mxu0 0
  %114 = vmatpush2.bf16.msra.mxu0 0
  %115 = vmatprep.subr.bf16.mxu0 0
  %116 = vmatpush2.bf16.msra.mxu0 0
  %117 = vmatprep.subr.bf16.mxu0 0
  %118 = vmatpush2.bf16.msra.mxu0 0
  %119 = vmatprep.subr.bf16.mxu0 0
  %120 = vmatpush2.bf16.msra.mxu0 0
  %121 = vmatprep.mubr.bf16.mxu0 0
  %122 = vmatmul.mubr.bf16.gmra.mxu0 %v24
  %v123 = vpop.f32.mrf.mxu0
  %v124 = vadd.f32 0.0, %v123
  %v125 = vpop.f32.mrf.mxu0
  %v126 = vpop.f32.mrf.mxu0
  %v127 = vpop.f32.mrf.mxu0
  %128 = vdwg.mxu0
  %v129 = vadd.f32 %v23, %v124
  %130 = vst [vmem:[#allocation2] sm:$0xff] %v129
  // Predicated region
  $region22: #{gnn_forward.11} parent=0 // pred_check
    %p131 = pneg %p18
  $region23: #{gnn_forward.11} parent=0 // pred_check_branch
    %133 = sbr.rel (%p131) target = $region25
  $region24: #{gnn_forward.11} parent=0 // pred_region
    %v134 = vld [vmem:[#allocation2] sm:$0xff]
    %v135 = vpack.c.bf16 %v134, %v134
    %v136 = vld [vmem:[%s2] sm:$0xf]
    %v137 = vld [vmem:[%s2 + $0x4] sm:$0xf]
    %v138 = vld [vmem:[%s2 + $0x8] sm:$0xf]
    %v139 = vld [vmem:[%s2 + $0xc] sm:$0xf]
    %v140 = vld [vmem:[%s2 + $0x10] sm:$0xf]
    %v141 = vld [vmem:[%s2 + $0x14] sm:$0xf]
    %v142 = vld [vmem:[%s2 + $0x18] sm:$0xf]
    %v143 = vld [vmem:[%s2 + $0x1c] sm:$0xf]
    %v144 = vld [vmem:[%s2 + $0x20] sm:$0xf]
    %v145 = vld [vmem:[%s2 + $0x24] sm:$0xf]
    %v146 = vld [vmem:[%s2 + $0x28] sm:$0xf]
    %v147 = vld [vmem:[%s2 + $0x2c] sm:$0xf]
    %v148 = vld [vmem:[%s2 + $0x30] sm:$0xf]
    %v149 = vld [vmem:[%s2 + $0x34] sm:$0xf]
    %v150 = vld [vmem:[%s2 + $0x38] sm:$0xf]
    %v151 = vld [vmem:[%s2 + $0x3c] sm:$0xf]
    %v152 = vld [vmem:[%s3] sm:$0xff]
    %v169 = vunpack.c.l.b16 %v136
    %v170 = vunpack.c.l.b16 %v137
    %v171 = vunpack.c.l.b16 %v138
    %v172 = vunpack.c.l.b16 %v139
    %v173 = vunpack.c.l.b16 %v140
    %v174 = vunpack.c.l.b16 %v141
    %v175 = vunpack.c.l.b16 %v142
    %v176 = vunpack.c.l.b16 %v143
    %v177 = vunpack.c.l.b16 %v144
    %v178 = vunpack.c.l.b16 %v145
    %v179 = vunpack.c.l.b16 %v146
    %v180 = vunpack.c.l.b16 %v147
    %v181 = vunpack.c.l.b16 %v148
    %v182 = vunpack.c.l.b16 %v149
    %v183 = vunpack.c.l.b16 %v150
    %v184 = vunpack.c.l.b16 %v151
    %v185 = vpack.c.b16 %v170, %v169
    %v186 = vpack.c.b16 %v172, %v171
    %v187 = vpack.c.b16 %v174, %v173
    %v188 = vpack.c.b16 %v176, %v175
    %v189 = vpack.c.b16 %v178, %v177
    %v190 = vpack.c.b16 %v180, %v179
    %v191 = vpack.c.b16 %v182, %v181
    %v192 = vpack.c.b16 %v184, %v183
    %201 = vmatprep.subr.bf16.mxu0 0
    %202 = vmatpush1.bf16.msra.mxu0 %v192
    %203 = vmatprep.subr.bf16.mxu0 0
    %204 = vmatpush1.bf16.msra.mxu0 %v191
    %205 = vmatprep.subr.bf16.mxu0 0
    %206 = vmatpush1.bf16.msra.mxu0 %v190
    %207 = vmatprep.subr.bf16.mxu0 0
    %208 = vmatpush1.bf16.msra.mxu0 %v189
    %209 = vmatprep.subr.bf16.mxu0 0
    %210 = vmatpush1.bf16.msra.mxu0 %v188
    %211 = vmatprep.subr.bf16.mxu0 0
    %212 = vmatpush1.bf16.msra.mxu0 %v187
    %213 = vmatprep.subr.bf16.mxu0 0
    %214 = vmatpush1.bf16.msra.mxu0 %v186
    %215 = vmatprep.subr.bf16.mxu0 0
    %216 = vmatpush1.bf16.msra.mxu0 %v185
    %217 = vmatprep.subr.bf16.mxu0 0
    %218 = vmatpush2.bf16.msra.mxu0 0
    %219 = vmatprep.subr.bf16.mxu0 0
    %220 = vmatpush2.bf16.msra.mxu0 0
    %221 = vmatprep.subr.bf16.mxu0 0
    %222 = vmatpush2.bf16.msra.mxu0 0
    %223 = vmatprep.subr.bf16.mxu0 0
    %224 = vmatpush2.bf16.msra.mxu0 0
    %225 = vmatprep.subr.bf16.mxu0 0
    %226 = vmatpush2.bf16.msra.mxu0 0
    %227 = vmatprep.subr.bf16.mxu0 0
    %228 = vmatpush2.bf16.msra.mxu0 0
    %229 = vmatprep.subr.bf16.mxu0 0
    %230 = vmatpush2.bf16.msra.mxu0 0
    %231 = vmatprep.subr.bf16.mxu0 0
    %232 = vmatpush2.bf16.msra.mxu0 0
    %233 = vmatprep.mubr.bf16.mxu0 0
    %234 = vmatmul.mubr.bf16.gmra.mxu0 %v135
    %v235 = vpop.f32.mrf.mxu0
    %v236 = vadd.f32 %v152, %v235
    %v237 = vpop.f32.mrf.mxu0
    %v238 = vpop.f32.mrf.mxu0
    %v239 = vpop.f32.mrf.mxu0
    %240 = vdwg.mxu0
    %241 = vst [vmem:[%s4] sm:$0xff] %v236
  $region25: #{gnn_forward.11} parent=0 // pred_fallthru
    _
  // Predicated region
  $region26: #{gnn_forward.11} parent=0 // pred_check
    _
  $region27: #{gnn_forward.11} parent=0 // pred_check_branch
    %243 = sbr.rel (0) target = $region29
  $region28: #{gnn_forward.11} parent=0 // pred_region
    _
  $region29: #{gnn_forward.11} parent=0 // pred_fallthru
    _
  // Predicated region
  $region30: #{gnn_forward.11} parent=0 // pred_check
    _
  $region31: #{gnn_forward.11} parent=0 // pred_check_branch
    %245 = sbr.rel (0) target = $region33
  $region32: #{gnn_forward.11} parent=0 // pred_region
    _
  $region33: #{gnn_forward.11} parent=0 // pred_fallthru
    _

// kernel: gnn_forward.6
$region0: #{gnn_forward.6}
  #allocation0 [shape = 'u32[]', space=smem, size = 0x4, offset = 0x4, fixed_abs, tag = 'smem constant byte address 0x4 - core index']
  #allocation1 [shape = 'u32[144,128]{1,0:T(1,128)}', space=vmem, size = 0x12000, scoped, tag = 'internal scratch']
  %s0 = inlined_call_operand.vmem [shape: bf16[128,128], index: 0, kind: input, shape index: {}]
  %s1 = inlined_call_operand.vmem [shape: bf16[128,128], index: 1, kind: input, shape index: {}]
  %s2 = inlined_call_operand.vmem [shape: bf16[128,128], index: 2, kind: output, shape index: {}]
  %s3 = sld [smem:[#allocation0]]
  $region18: #{gnn_forward.6} parent=0
    _
  %s5 = ssub.s32 1, %s3
  %s6 = scalar_select 0, %s5, %s3
  // Predicated region
  $region2: #{gnn_forward.6} parent=0 // pred_check
    _
  $region3: #{gnn_forward.6} parent=0 // pred_check_branch
    %8 = sbr.rel (0) target = $region5
  $region4: #{gnn_forward.6} parent=0 // pred_region
    _
  $region5: #{gnn_forward.6} parent=0 // pred_fallthru
    _
  // Predicated region
  $region6: #{gnn_forward.6} parent=0 // pred_check
    _
  $region7: #{gnn_forward.6} parent=0 // pred_check_branch
    %10 = sbr.rel (0) target = $region9
  $region8: #{gnn_forward.6} parent=0 // pred_region
    _
  $region9: #{gnn_forward.6} parent=0 // pred_fallthru
    _
  %v12 = vld [vmem:[%s0] sm:$0xf]
  %v13 = vld [vmem:[%s0 + $0x4] sm:$0xf]
  %v14 = vld [vmem:[%s0 + $0x8] sm:$0xf]
  %v15 = vld [vmem:[%s0 + $0xc] sm:$0xf]
  %v16 = vld [vmem:[%s0 + $0x10] sm:$0xf]
  %v17 = vld [vmem:[%s0 + $0x14] sm:$0xf]
  %v18 = vld [vmem:[%s0 + $0x18] sm:$0xf]
  %v19 = vld [vmem:[%s0 + $0x1c] sm:$0xf]
  %v20 = vld [vmem:[%s0 + $0x20] sm:$0xf]
  %v21 = vld [vmem:[%s0 + $0x24] sm:$0xf]
  %v22 = vld [vmem:[%s0 + $0x28] sm:$0xf]
  %v23 = vld [vmem:[%s0 + $0x2c] sm:$0xf]
  %v24 = vld [vmem:[%s0 + $0x30] sm:$0xf]
  %v25 = vld [vmem:[%s0 + $0x34] sm:$0xf]
  %v26 = vld [vmem:[%s0 + $0x38] sm:$0xf]
  %v27 = vld [vmem:[%s0 + $0x3c] sm:$0xf]
  %v28 = vld [vmem:[%s1] sm:$0xf]
  %v29 = vld [vmem:[%s1 + $0x4] sm:$0xf]
  %v30 = vld [vmem:[%s1 + $0x8] sm:$0xf]
  %v31 = vld [vmem:[%s1 + $0xc] sm:$0xf]
  %v32 = vld [vmem:[%s1 + $0x10] sm:$0xf]
  %v33 = vld [vmem:[%s1 + $0x14] sm:$0xf]
  %v34 = vld [vmem:[%s1 + $0x18] sm:$0xf]
  %v35 = vld [vmem:[%s1 + $0x1c] sm:$0xf]
  %v36 = vld [vmem:[%s1 + $0x20] sm:$0xf]
  %v37 = vld [vmem:[%s1 + $0x24] sm:$0xf]
  %v38 = vld [vmem:[%s1 + $0x28] sm:$0xf]
  %v39 = vld [vmem:[%s1 + $0x2c] sm:$0xf]
  %v40 = vld [vmem:[%s1 + $0x30] sm:$0xf]
  %v41 = vld [vmem:[%s1 + $0x34] sm:$0xf]
  %v42 = vld [vmem:[%s1 + $0x38] sm:$0xf]
  %v43 = vld [vmem:[%s1 + $0x3c] sm:$0xf]
  %v60 = vunpack.c.l.b16 %v12
  %v61 = vunpack.c.l.b16 %v13
  %v62 = vunpack.c.l.b16 %v14
  %v63 = vunpack.c.l.b16 %v15
  %v64 = vunpack.c.l.b16 %v16
  %v65 = vunpack.c.l.b16 %v17
  %v66 = vunpack.c.l.b16 %v18
  %v67 = vunpack.c.l.b16 %v19
  %v68 = vunpack.c.l.b16 %v20
  %v69 = vunpack.c.l.b16 %v21
  %v70 = vunpack.c.l.b16 %v22
  %v71 = vunpack.c.l.b16 %v23
  %v72 = vunpack.c.l.b16 %v24
  %v73 = vunpack.c.l.b16 %v25
  %v74 = vunpack.c.l.b16 %v26
  %v75 = vunpack.c.l.b16 %v27
  %v76 = vpack.c.b16 %v61, %v60
  %v77 = vpack.c.b16 %v63, %v62
  %v78 = vpack.c.b16 %v65, %v64
  %v79 = vpack.c.b16 %v67, %v66
  %v80 = vpack.c.b16 %v69, %v68
  %v81 = vpack.c.b16 %v71, %v70
  %v82 = vpack.c.b16 %v73, %v72
  %v83 = vpack.c.b16 %v75, %v74
  %v108 = vunpack.c.l.b16 %v28
  %v109 = vunpack.c.l.b16 %v29
  %v110 = vunpack.c.l.b16 %v30
  %v111 = vunpack.c.l.b16 %v31
  %v112 = vunpack.c.l.b16 %v32
  %v113 = vunpack.c.l.b16 %v33
  %v114 = vunpack.c.l.b16 %v34
  %v115 = vunpack.c.l.b16 %v35
  %v116 = vunpack.c.l.b16 %v36
  %v117 = vunpack.c.l.b16 %v37
  %v118 = vunpack.c.l.b16 %v38
  %v119 = vunpack.c.l.b16 %v39
  %v120 = vunpack.c.l.b16 %v40
  %v121 = vunpack.c.l.b16 %v41
  %v122 = vunpack.c.l.b16 %v42
  %v123 = vunpack.c.l.b16 %v43
  %v124 = vpack.c.b16 %v109, %v108
  %v125 = vpack.c.b16 %v111, %v110
  %v126 = vpack.c.b16 %v113, %v112
  %v127 = vpack.c.b16 %v115, %v114
  %v128 = vpack.c.b16 %v117, %v116
  %v129 = vpack.c.b16 %v119, %v118
  %v130 = vpack.c.b16 %v121, %v120
  %v131 = vpack.c.b16 %v123, %v122
  %140 = vmatprep.subr.bf16.mxu0 0
  %141 = vmatpush1.bf16.msra.mxu0 %v131
  %142 = vmatprep.subr.bf16.mxu0 0
  %143 = vmatpush1.bf16.msra.mxu0 %v130
  %144 = vmatprep.subr.bf16.mxu0 0
  %145 = vmatpush1.bf16.msra.mxu0 %v129
  %146 = vmatprep.subr.bf16.mxu0 0
  %147 = vmatpush1.bf16.msra.mxu0 %v128
  %148 = vmatprep.subr.bf16.mxu0 0
  %149 = vmatpush1.bf16.msra.mxu0 %v127
  %150 = vmatprep.subr.bf16.mxu0 0
  %151 = vmatpush1.bf16.msra.mxu0 %v126
  %152 = vmatprep.subr.bf16.mxu0 0
  %153 = vmatpush1.bf16.msra.mxu0 %v125
  %154 = vmatprep.subr.bf16.mxu0 0
  %155 = vmatpush1.bf16.msra.mxu0 %v124
  %156 = vmatprep.subr.bf16.mxu0 0
  %157 = vmatpush2.bf16.msra.mxu0 0
  %158 = vmatprep.subr.bf16.mxu0 0
  %159 = vmatpush2.bf16.msra.mxu0 0
  %160 = vmatprep.subr.bf16.mxu0 0
  %161 = vmatpush2.bf16.msra.mxu0 0
  %162 = vmatprep.subr.bf16.mxu0 0
  %163 = vmatpush2.bf16.msra.mxu0 0
  %164 = vmatprep.subr.bf16.mxu0 0
  %165 = vmatpush2.bf16.msra.mxu0 0
  %166 = vmatprep.subr.bf16.mxu0 0
  %167 = vmatpush2.bf16.msra.mxu0 0
  %168 = vmatprep.subr.bf16.mxu0 0
  %169 = vmatpush2.bf16.msra.mxu0 0
  %170 = vmatprep.subr.bf16.mxu0 0
  %171 = vmatpush2.bf16.msra.mxu0 0
  %172 = vmatprep.mubr.bf16.mxu0 0
  %173 = vmatmul.mubr.bf16.gmra.mxu0 %v76
  %v174 = vpop.f32.mrf.mxu0
  %v175 = vadd.f32 0.0, %v174
  %v176 = vpop.f32.mrf.mxu0
  %v177 = vpop.f32.mrf.mxu0
  %v178 = vadd.f32 0.0, %v177
  %v179 = vpop.f32.mrf.mxu0
  %180 = vmatprep.mubr.bf16.mxu0 0
  %181 = vmatmul.mubr.bf16.gmra.mxu0 %v77
  %v182 = vpop.f32.mrf.mxu0
  %v183 = vadd.f32 0.0, %v182
  %v184 = vpop.f32.mrf.mxu0
  %v185 = vpop.f32.mrf.mxu0
  %v186 = vadd.f32 0.0, %v185
  %v187 = vpop.f32.mrf.mxu0
  %188 = vmatprep.mubr.bf16.mxu0 0
  %189 = vmatmul.mubr.bf16.gmra.mxu0 %v78
  %v190 = vpop.f32.mrf.mxu0
  %v191 = vadd.f32 0.0, %v190
  %v192 = vpop.f32.mrf.mxu0
  %v193 = vpop.f32.mrf.mxu0
  %v194 = vadd.f32 0.0, %v193
  %v195 = vpop.f32.mrf.mxu0
  %196 = vmatprep.mubr.bf16.mxu0 0
  %197 = vmatmul.mubr.bf16.gmra.mxu0 %v79
  %v198 = vpop.f32.mrf.mxu0
  %v199 = vadd.f32 0.0, %v198
  %v200 = vpop.f32.mrf.mxu0
  %v201 = vpop.f32.mrf.mxu0
  %v202 = vadd.f32 0.0, %v201
  %v203 = vpop.f32.mrf.mxu0
  %204 = vmatprep.mubr.bf16.mxu0 0
  %205 = vmatmul.mubr.bf16.gmra.mxu0 %v80
  %v206 = vpop.f32.mrf.mxu0
  %v207 = vadd.f32 0.0, %v206
  %v208 = vpop.f32.mrf.mxu0
  %v209 = vpop.f32.mrf.mxu0
  %v210 = vadd.f32 0.0, %v209
  %v211 = vpop.f32.mrf.mxu0
  %212 = vmatprep.mubr.bf16.mxu0 0
  %213 = vmatmul.mubr.bf16.gmra.mxu0 %v81
  %v214 = vpop.f32.mrf.mxu0
  %v215 = vadd.f32 0.0, %v214
  %v216 = vpop.f32.mrf.mxu0
  %v217 = vpop.f32.mrf.mxu0
  %v218 = vadd.f32 0.0, %v217
  %v219 = vpop.f32.mrf.mxu0
  %220 = vmatprep.mubr.bf16.mxu0 0
  %221 = vmatmul.mubr.bf16.gmra.mxu0 %v82
  %v222 = vpop.f32.mrf.mxu0
  %v223 = vadd.f32 0.0, %v222
  %v224 = vpop.f32.mrf.mxu0
  %v225 = vpop.f32.mrf.mxu0
  %v226 = vadd.f32 0.0, %v225
  %v227 = vpop.f32.mrf.mxu0
  %228 = vmatprep.mubr.bf16.mxu0 0
  %229 = vmatmul.mubr.bf16.gmra.mxu0 %v83
  %v230 = vpop.f32.mrf.mxu0
  %v231 = vadd.f32 0.0, %v230
  %v232 = vpop.f32.mrf.mxu0
  %v233 = vpop.f32.mrf.mxu0
  %v234 = vadd.f32 0.0, %v233
  %v235 = vpop.f32.mrf.mxu0
  %236 = vdwg.mxu0
  %v237 = vpack.c.bf16 %v178, %v175
  %v238 = vpack.c.bf16 %v186, %v183
  %v239 = vpack.c.bf16 %v194, %v191
  %v240 = vpack.c.bf16 %v202, %v199
  %v241 = vpack.c.bf16 %v210, %v207
  %v242 = vpack.c.bf16 %v218, %v215
  %v243 = vpack.c.bf16 %v226, %v223
  %v244 = vpack.c.bf16 %v234, %v231
  %v253 = vunpack.c.l.b16 %v237
  %v254 = vunpack.c.h.b16 %v237
  %v255 = vunpack.c.l.b16 %v238
  %v256 = vunpack.c.h.b16 %v238
  %v257 = vunpack.c.l.b16 %v239
  %v258 = vunpack.c.h.b16 %v239
  %v259 = vunpack.c.l.b16 %v240
  %v260 = vunpack.c.h.b16 %v240
  %v261 = vunpack.c.l.b16 %v241
  %v262 = vunpack.c.h.b16 %v241
  %v263 = vunpack.c.l.b16 %v242
  %v264 = vunpack.c.h.b16 %v242
  %v265 = vunpack.c.l.b16 %v243
  %v266 = vunpack.c.h.b16 %v243
  %v267 = vunpack.c.l.b16 %v244
  %v268 = vunpack.c.h.b16 %v244
  %v269 = vpack.c.b16 %v253, %v253
  %v270 = vpack.c.b16 %v254, %v254
  %v271 = vpack.c.b16 %v255, %v255
  %v272 = vpack.c.b16 %v256, %v256
  %v273 = vpack.c.b16 %v257, %v257
  %v274 = vpack.c.b16 %v258, %v258
  %v275 = vpack.c.b16 %v259, %v259
  %v276 = vpack.c.b16 %v260, %v260
  %v277 = vpack.c.b16 %v261, %v261
  %v278 = vpack.c.b16 %v262, %v262
  %v279 = vpack.c.b16 %v263, %v263
  %v280 = vpack.c.b16 %v264, %v264
  %v281 = vpack.c.b16 %v265, %v265
  %v282 = vpack.c.b16 %v266, %v266
  %v283 = vpack.c.b16 %v267, %v267
  %v284 = vpack.c.b16 %v268, %v268
  %301 = vst [vmem:[%s2] sm:$0xf] %v269
  %302 = vst [vmem:[%s2 + $0x4] sm:$0xf] %v270
  %303 = vst [vmem:[%s2 + $0x8] sm:$0xf] %v271
  %304 = vst [vmem:[%s2 + $0xc] sm:$0xf] %v272
  %305 = vst [vmem:[%s2 + $0x10] sm:$0xf] %v273
  %306 = vst [vmem:[%s2 + $0x14] sm:$0xf] %v274
  %307 = vst [vmem:[%s2 + $0x18] sm:$0xf] %v275
  %308 = vst [vmem:[%s2 + $0x1c] sm:$0xf] %v276
  %309 = vst [vmem:[%s2 + $0x20] sm:$0xf] %v277
  %310 = vst [vmem:[%s2 + $0x24] sm:$0xf] %v278
  %311 = vst [vmem:[%s2 + $0x28] sm:$0xf] %v279
  %312 = vst [vmem:[%s2 + $0x2c] sm:$0xf] %v280
  %313 = vst [vmem:[%s2 + $0x30] sm:$0xf] %v281
  %314 = vst [vmem:[%s2 + $0x34] sm:$0xf] %v282
  %315 = vst [vmem:[%s2 + $0x38] sm:$0xf] %v283
  %316 = vst [vmem:[%s2 + $0x3c] sm:$0xf] %v284
  // Predicated region
  $region10: #{gnn_forward.6} parent=0 // pred_check
    _
  $region11: #{gnn_forward.6} parent=0 // pred_check_branch
    %318 = sbr.rel (0) target = $region13
  $region12: #{gnn_forward.6} parent=0 // pred_region
    _
  $region13: #{gnn_forward.6} parent=0 // pred_fallthru
    _
  // Predicated region
  $region14: #{gnn_forward.6} parent=0 // pred_check
    _
  $region15: #{gnn_forward.6} parent=0 // pred_check_branch
    %320 = sbr.rel (0) target = $region17
  $region16: #{gnn_forward.6} parent=0 // pred_region
    _
  $region17: #{gnn_forward.6} parent=0 // pred_fallthru
    _

// kernel: gnn_forward.7
$region0: #{gnn_forward.7}
  #allocation0 [shape = 'u32[]', space=smem, size = 0x4, offset = 0x4, fixed_abs, tag = 'smem constant byte address 0x4 - core index']
  #allocation1 [shape = 'u32[144,128]{1,0:T(1,128)}', space=vmem, size = 0x12000, scoped, tag = 'internal scratch']
  #allocation2 [shape = 'f32[128,128]{1,0:T(8,128)}', space=vmem, size = 0x10000, scoped, tag = 'scratch operand']
  %s0 = inlined_call_operand.vmem [shape: bf16[128,128], index: 0, kind: input, shape index: {}]
  %s1 = inlined_call_operand.vmem [shape: bf16[128,128], index: 1, kind: input, shape index: {}]
  %s2 = inlined_call_operand.vmem [shape: f32[1,128], index: 2, kind: input, shape index: {}]
  %s3 = inlined_call_operand.vmem [shape: bf16[128,128], index: 3, kind: output, shape index: {}]
  %s4 = sld [smem:[#allocation0]]
  $region30: #{gnn_forward.7} parent=0
    _
  %s6 = ssub.s32 1, %s4
  %s7 = scalar_select 0, %s6, %s4
  // Predicated region
  $region2: #{gnn_forward.7} parent=0 // pred_check
    _
  $region3: #{gnn_forward.7} parent=0 // pred_check_branch
    %9 = sbr.rel (0) target = $region5
  $region4: #{gnn_forward.7} parent=0 // pred_region
    _
  $region5: #{gnn_forward.7} parent=0 // pred_fallthru
    _
  // Predicated region
  $region6: #{gnn_forward.7} parent=0 // pred_check
    _
  $region7: #{gnn_forward.7} parent=0 // pred_check_branch
    %11 = sbr.rel (0) target = $region9
  $region8: #{gnn_forward.7} parent=0 // pred_region
    _
  $region9: #{gnn_forward.7} parent=0 // pred_fallthru
    _
  // Predicated region
  $region10: #{gnn_forward.7} parent=0 // pred_check
    _
  $region11: #{gnn_forward.7} parent=0 // pred_check_branch
    %13 = sbr.rel (0) target = $region13
  $region12: #{gnn_forward.7} parent=0 // pred_region
    _
  $region13: #{gnn_forward.7} parent=0 // pred_fallthru
    _
  %p15 = scmp.eq.s32.totalorder 0, 0
  // Predicated region
  $region14: #{gnn_forward.7} parent=0 // pred_check
    %p16 = pneg %p15
  $region15: #{gnn_forward.7} parent=0 // pred_check_branch
    %18 = sbr.rel (%p16) target = $region17
  $region16: #{gnn_forward.7} parent=0 // pred_region
    %19 = vst [vmem:[#allocation2] sm:$0xff] 0.0
    %20 = vst [vmem:[#allocation2 + $0x8] sm:$0xff] 0.0
    %21 = vst [vmem:[#allocation2 + $0x10] sm:$0xff] 0.0
    %22 = vst [vmem:[#allocation2 + $0x18] sm:$0xff] 0.0
    %23 = vst [vmem:[#allocation2 + $0x20] sm:$0xff] 0.0
    %24 = vst [vmem:[#allocation2 + $0x28] sm:$0xff] 0.0
    %25 = vst [vmem:[#allocation2 + $0x30] sm:$0xff] 0.0
    %26 = vst [vmem:[#allocation2 + $0x38] sm:$0xff] 0.0
    %27 = vst [vmem:[#allocation2 + $0x40] sm:$0xff] 0.0
    %28 = vst [vmem:[#allocation2 + $0x48] sm:$0xff] 0.0
    %29 = vst [vmem:[#allocation2 + $0x50] sm:$0xff] 0.0
    %30 = vst [vmem:[#allocation2 + $0x58] sm:$0xff] 0.0
    %31 = vst [vmem:[#allocation2 + $0x60] sm:$0xff] 0.0
    %32 = vst [vmem:[#allocation2 + $0x68] sm:$0xff] 0.0
    %33 = vst [vmem:[#allocation2 + $0x70] sm:$0xff] 0.0
    %34 = vst [vmem:[#allocation2 + $0x78] sm:$0xff] 0.0
  $region17: #{gnn_forward.7} parent=0 // pred_fallthru
    _
  %v35 = vld [vmem:[#allocation2] sm:$0xff]
  %v36 = vld [vmem:[#allocation2 + $0x8] sm:$0xff]
  %v37 = vld [vmem:[#allocation2 + $0x10] sm:$0xff]
  %v38 = vld [vmem:[#allocation2 + $0x18] sm:$0xff]
  %v39 = vld [vmem:[#allocation2 + $0x20] sm:$0xff]
  %v40 = vld [vmem:[#allocation2 + $0x28] sm:$0xff]
  %v41 = vld [vmem:[#allocation2 + $0x30] sm:$0xff]
  %v42 = vld [vmem:[#allocation2 + $0x38] sm:$0xff]
  %v43 = vld [vmem:[#allocation2 + $0x40] sm:$0xff]
  %v44 = vld [vmem:[#allocation2 + $0x48] sm:$0xff]
  %v45 = vld [vmem:[#allocation2 + $0x50] sm:$0xff]
  %v46 = vld [vmem:[#allocation2 + $0x58] sm:$0xff]
  %v47 = vld [vmem:[#allocation2 + $0x60] sm:$0xff]
  %v48 = vld [vmem:[#allocation2 + $0x68] sm:$0xff]
  %v49 = vld [vmem:[#allocation2 + $0x70] sm:$0xff]
  %v50 = vld [vmem:[#allocation2 + $0x78] sm:$0xff]
  %v51 = vld [vmem:[%s0] sm:$0xf]
  %v52 = vld [vmem:[%s0 + $0x4] sm:$0xf]
  %v53 = vld [vmem:[%s0 + $0x8] sm:$0xf]
  %v54 = vld [vmem:[%s0 + $0xc] sm:$0xf]
  %v55 = vld [vmem:[%s0 + $0x10] sm:$0xf]
  %v56 = vld [vmem:[%s0 + $0x14] sm:$0xf]
  %v57 = vld [vmem:[%s0 + $0x18] sm:$0xf]
  %v58 = vld [vmem:[%s0 + $0x1c] sm:$0xf]
  %v59 = vld [vmem:[%s0 + $0x20] sm:$0xf]
  %v60 = vld [vmem:[%s0 + $0x24] sm:$0xf]
  %v61 = vld [vmem:[%s0 + $0x28] sm:$0xf]
  %v62 = vld [vmem:[%s0 + $0x2c] sm:$0xf]
  %v63 = vld [vmem:[%s0 + $0x30] sm:$0xf]
  %v64 = vld [vmem:[%s0 + $0x34] sm:$0xf]
  %v65 = vld [vmem:[%s0 + $0x38] sm:$0xf]
  %v66 = vld [vmem:[%s0 + $0x3c] sm:$0xf]
  %v67 = vld [vmem:[%s1] sm:$0xf]
  %v68 = vld [vmem:[%s1 + $0x4] sm:$0xf]
  %v69 = vld [vmem:[%s1 + $0x8] sm:$0xf]
  %v70 = vld [vmem:[%s1 + $0xc] sm:$0xf]
  %v71 = vld [vmem:[%s1 + $0x10] sm:$0xf]
  %v72 = vld [vmem:[%s1 + $0x14] sm:$0xf]
  %v73 = vld [vmem:[%s1 + $0x18] sm:$0xf]
  %v74 = vld [vmem:[%s1 + $0x1c] sm:$0xf]
  %v75 = vld [vmem:[%s1 + $0x20] sm:$0xf]
  %v76 = vld [vmem:[%s1 + $0x24] sm:$0xf]
  %v77 = vld [vmem:[%s1 + $0x28] sm:$0xf]
  %v78 = vld [vmem:[%s1 + $0x2c] sm:$0xf]
  %v79 = vld [vmem:[%s1 + $0x30] sm:$0xf]
  %v80 = vld [vmem:[%s1 + $0x34] sm:$0xf]
  %v81 = vld [vmem:[%s1 + $0x38] sm:$0xf]
  %v82 = vld [vmem:[%s1 + $0x3c] sm:$0xf]
  %v99 = vunpack.c.l.b16 %v51
  %v100 = vunpack.c.l.b16 %v52
  %v101 = vunpack.c.l.b16 %v53
  %v102 = vunpack.c.l.b16 %v54
  %v103 = vunpack.c.l.b16 %v55
  %v104 = vunpack.c.l.b16 %v56
  %v105 = vunpack.c.l.b16 %v57
  %v106 = vunpack.c.l.b16 %v58
  %v107 = vunpack.c.l.b16 %v59
  %v108 = vunpack.c.l.b16 %v60
  %v109 = vunpack.c.l.b16 %v61
  %v110 = vunpack.c.l.b16 %v62
  %v111 = vunpack.c.l.b16 %v63
  %v112 = vunpack.c.l.b16 %v64
  %v113 = vunpack.c.l.b16 %v65
  %v114 = vunpack.c.l.b16 %v66
  %v115 = vpack.c.b16 %v100, %v99
  %v116 = vpack.c.b16 %v102, %v101
  %v117 = vpack.c.b16 %v104, %v103
  %v118 = vpack.c.b16 %v106, %v105
  %v119 = vpack.c.b16 %v108, %v107
  %v120 = vpack.c.b16 %v110, %v109
  %v121 = vpack.c.b16 %v112, %v111
  %v122 = vpack.c.b16 %v114, %v113
  %v147 = vunpack.c.l.b16 %v67
  %v148 = vunpack.c.l.b16 %v68
  %v149 = vunpack.c.l.b16 %v69
  %v150 = vunpack.c.l.b16 %v70
  %v151 = vunpack.c.l.b16 %v71
  %v152 = vunpack.c.l.b16 %v72
  %v153 = vunpack.c.l.b16 %v73
  %v154 = vunpack.c.l.b16 %v74
  %v155 = vunpack.c.l.b16 %v75
  %v156 = vunpack.c.l.b16 %v76
  %v157 = vunpack.c.l.b16 %v77
  %v158 = vunpack.c.l.b16 %v78
  %v159 = vunpack.c.l.b16 %v79
  %v160 = vunpack.c.l.b16 %v80
  %v161 = vunpack.c.l.b16 %v81
  %v162 = vunpack.c.l.b16 %v82
  %v163 = vpack.c.b16 %v148, %v147
  %v164 = vpack.c.b16 %v150, %v149
  %v165 = vpack.c.b16 %v152, %v151
  %v166 = vpack.c.b16 %v154, %v153
  %v167 = vpack.c.b16 %v156, %v155
  %v168 = vpack.c.b16 %v158, %v157
  %v169 = vpack.c.b16 %v160, %v159
  %v170 = vpack.c.b16 %v162, %v161
  %179 = vmatprep.subr.bf16.mxu0 0
  %180 = vmatpush1.bf16.msra.mxu0 %v170
  %181 = vmatprep.subr.bf16.mxu0 0
  %182 = vmatpush1.bf16.msra.mxu0 %v169
  %183 = vmatprep.subr.bf16.mxu0 0
  %184 = vmatpush1.bf16.msra.mxu0 %v168
  %185 = vmatprep.subr.bf16.mxu0 0
  %186 = vmatpush1.bf16.msra.mxu0 %v167
  %187 = vmatprep.subr.bf16.mxu0 0
  %188 = vmatpush1.bf16.msra.mxu0 %v166
  %189 = vmatprep.subr.bf16.mxu0 0
  %190 = vmatpush1.bf16.msra.mxu0 %v165
  %191 = vmatprep.subr.bf16.mxu0 0
  %192 = vmatpush1.bf16.msra.mxu0 %v164
  %193 = vmatprep.subr.bf16.mxu0 0
  %194 = vmatpush1.bf16.msra.mxu0 %v163
  %195 = vmatprep.subr.bf16.mxu0 0
  %196 = vmatpush2.bf16.msra.mxu0 0
  %197 = vmatprep.subr.bf16.mxu0 0
  %198 = vmatpush2.bf16.msra.mxu0 0
  %199 = vmatprep.subr.bf16.mxu0 0
  %200 = vmatpush2.bf16.msra.mxu0 0
  %201 = vmatprep.subr.bf16.mxu0 0
  %202 = vmatpush2.bf16.msra.mxu0 0
  %203 = vmatprep.subr.bf16.mxu0 0
  %204 = vmatpush2.bf16.msra.mxu0 0
  %205 = vmatprep.subr.bf16.mxu0 0
  %206 = vmatpush2.bf16.msra.mxu0 0
  %207 = vmatprep.subr.bf16.mxu0 0
  %208 = vmatpush2.bf16.msra.mxu0 0
  %209 = vmatprep.subr.bf16.mxu0 0
  %210 = vmatpush2.bf16.msra.mxu0 0
  %211 = vmatprep.mubr.bf16.mxu0 0
  %212 = vmatmul.mubr.bf16.gmra.mxu0 %v115
  %v213 = vpop.f32.mrf.mxu0
  %v214 = vadd.f32 0.0, %v213
  %v215 = vpop.f32.mrf.mxu0
  %v216 = vpop.f32.mrf.mxu0
  %v217 = vadd.f32 0.0, %v216
  %v218 = vpop.f32.mrf.mxu0
  %219 = vmatprep.mubr.bf16.mxu0 0
  %220 = vmatmul.mubr.bf16.gmra.mxu0 %v116
  %v221 = vpop.f32.mrf.mxu0
  %v222 = vadd.f32 0.0, %v221
  %v223 = vpop.f32.mrf.mxu0
  %v224 = vpop.f32.mrf.mxu0
  %v225 = vadd.f32 0.0, %v224
  %v226 = vpop.f32.mrf.mxu0
  %227 = vmatprep.mubr.bf16.mxu0 0
  %228 = vmatmul.mubr.bf16.gmra.mxu0 %v117
  %v229 = vpop.f32.mrf.mxu0
  %v230 = vadd.f32 0.0, %v229
  %v231 = vpop.f32.mrf.mxu0
  %v232 = vpop.f32.mrf.mxu0
  %v233 = vadd.f32 0.0, %v232
  %v234 = vpop.f32.mrf.mxu0
  %235 = vmatprep.mubr.bf16.mxu0 0
  %236 = vmatmul.mubr.bf16.gmra.mxu0 %v118
  %v237 = vpop.f32.mrf.mxu0
  %v238 = vadd.f32 0.0, %v237
  %v239 = vpop.f32.mrf.mxu0
  %v240 = vpop.f32.mrf.mxu0
  %v241 = vadd.f32 0.0, %v240
  %v242 = vpop.f32.mrf.mxu0
  %243 = vmatprep.mubr.bf16.mxu0 0
  %244 = vmatmul.mubr.bf16.gmra.mxu0 %v119
  %v245 = vpop.f32.mrf.mxu0
  %v246 = vadd.f32 0.0, %v245
  %v247 = vpop.f32.mrf.mxu0
  %v248 = vpop.f32.mrf.mxu0
  %v249 = vadd.f32 0.0, %v248
  %v250 = vpop.f32.mrf.mxu0
  %251 = vmatprep.mubr.bf16.mxu0 0
  %252 = vmatmul.mubr.bf16.gmra.mxu0 %v120
  %v253 = vpop.f32.mrf.mxu0
  %v254 = vadd.f32 0.0, %v253
  %v255 = vpop.f32.mrf.mxu0
  %v256 = vpop.f32.mrf.mxu0
  %v257 = vadd.f32 0.0, %v256
  %v258 = vpop.f32.mrf.mxu0
  %259 = vmatprep.mubr.bf16.mxu0 0
  %260 = vmatmul.mubr.bf16.gmra.mxu0 %v121
  %v261 = vpop.f32.mrf.mxu0
  %v262 = vadd.f32 0.0, %v261
  %v263 = vpop.f32.mrf.mxu0
  %v264 = vpop.f32.mrf.mxu0
  %v265 = vadd.f32 0.0, %v264
  %v266 = vpop.f32.mrf.mxu0
  %267 = vmatprep.mubr.bf16.mxu0 0
  %268 = vmatmul.mubr.bf16.gmra.mxu0 %v122
  %v269 = vpop.f32.mrf.mxu0
  %v270 = vadd.f32 0.0, %v269
  %v271 = vpop.f32.mrf.mxu0
  %v272 = vpop.f32.mrf.mxu0
  %v273 = vadd.f32 0.0, %v272
  %v274 = vpop.f32.mrf.mxu0
  %275 = vdwg.mxu0
  %v276 = vadd.f32 %v35, %v214
  %v277 = vadd.f32 %v36, %v217
  %v278 = vadd.f32 %v37, %v222
  %v279 = vadd.f32 %v38, %v225
  %v280 = vadd.f32 %v39, %v230
  %v281 = vadd.f32 %v40, %v233
  %v282 = vadd.f32 %v41, %v238
  %v283 = vadd.f32 %v42, %v241
  %v284 = vadd.f32 %v43, %v246
  %v285 = vadd.f32 %v44, %v249
  %v286 = vadd.f32 %v45, %v254
  %v287 = vadd.f32 %v46, %v257
  %v288 = vadd.f32 %v47, %v262
  %v289 = vadd.f32 %v48, %v265
  %v290 = vadd.f32 %v49, %v270
  %v291 = vadd.f32 %v50, %v273
  %292 = vst [vmem:[#allocation2] sm:$0xff] %v276
  %293 = vst [vmem:[#allocation2 + $0x8] sm:$0xff] %v277
  %294 = vst [vmem:[#allocation2 + $0x10] sm:$0xff] %v278
  %295 = vst [vmem:[#allocation2 + $0x18] sm:$0xff] %v279
  %296 = vst [vmem:[#allocation2 + $0x20] sm:$0xff] %v280
  %297 = vst [vmem:[#allocation2 + $0x28] sm:$0xff] %v281
  %298 = vst [vmem:[#allocation2 + $0x30] sm:$0xff] %v282
  %299 = vst [vmem:[#allocation2 + $0x38] sm:$0xff] %v283
  %300 = vst [vmem:[#allocation2 + $0x40] sm:$0xff] %v284
  %301 = vst [vmem:[#allocation2 + $0x48] sm:$0xff] %v285
  %302 = vst [vmem:[#allocation2 + $0x50] sm:$0xff] %v286
  %303 = vst [vmem:[#allocation2 + $0x58] sm:$0xff] %v287
  %304 = vst [vmem:[#allocation2 + $0x60] sm:$0xff] %v288
  %305 = vst [vmem:[#allocation2 + $0x68] sm:$0xff] %v289
  %306 = vst [vmem:[#allocation2 + $0x70] sm:$0xff] %v290
  %307 = vst [vmem:[#allocation2 + $0x78] sm:$0xff] %v291
  // Predicated region
  $region18: #{gnn_forward.7} parent=0 // pred_check
    %p308 = pneg %p15
  $region19: #{gnn_forward.7} parent=0 // pred_check_branch
    %310 = sbr.rel (%p308) target = $region21
  $region20: #{gnn_forward.7} parent=0 // pred_region
    %v311 = vld [vmem:[#allocation2] sm:$0xff]
    %v312 = vld [vmem:[#allocation2 + $0x8] sm:$0xff]
    %v313 = vld [vmem:[#allocation2 + $0x10] sm:$0xff]
    %v314 = vld [vmem:[#allocation2 + $0x18] sm:$0xff]
    %v315 = vld [vmem:[#allocation2 + $0x20] sm:$0xff]
    %v316 = vld [vmem:[#allocation2 + $0x28] sm:$0xff]
    %v317 = vld [vmem:[#allocation2 + $0x30] sm:$0xff]
    %v318 = vld [vmem:[#allocation2 + $0x38] sm:$0xff]
    %v319 = vld [vmem:[#allocation2 + $0x40] sm:$0xff]
    %v320 = vld [vmem:[#allocation2 + $0x48] sm:$0xff]
    %v321 = vld [vmem:[#allocation2 + $0x50] sm:$0xff]
    %v322 = vld [vmem:[#allocation2 + $0x58] sm:$0xff]
    %v323 = vld [vmem:[#allocation2 + $0x60] sm:$0xff]
    %v324 = vld [vmem:[#allocation2 + $0x68] sm:$0xff]
    %v325 = vld [vmem:[#allocation2 + $0x70] sm:$0xff]
    %v326 = vld [vmem:[#allocation2 + $0x78] sm:$0xff]
    %v327 = vld [vmem:[%s2] sm:$0x1]
    %v329 = vlaneseq
    %v330 = vshrl.u32 %v329, 7
    %v331 = vsub.s32 0, %v330
    %v332 = vrot.slane %v327, %v331
    %v334 = vadd.f32 %v311, %v332
    %v335 = vadd.f32 %v312, %v332
    %v336 = vadd.f32 %v313, %v332
    %v337 = vadd.f32 %v314, %v332
    %v338 = vadd.f32 %v315, %v332
    %v339 = vadd.f32 %v316, %v332
    %v340 = vadd.f32 %v317, %v332
    %v341 = vadd.f32 %v318, %v332
    %v342 = vadd.f32 %v319, %v332
    %v343 = vadd.f32 %v320, %v332
    %v344 = vadd.f32 %v321, %v332
    %v345 = vadd.f32 %v322, %v332
    %v346 = vadd.f32 %v323, %v332
    %v347 = vadd.f32 %v324, %v332
    %v348 = vadd.f32 %v325, %v332
    %v349 = vadd.f32 %v326, %v332
    %v350 = vmax.f32 %v334, 0.0
    %v351 = vmax.f32 %v335, 0.0
    %v352 = vmax.f32 %v336, 0.0
    %v353 = vmax.f32 %v337, 0.0
    %v354 = vmax.f32 %v338, 0.0
    %v355 = vmax.f32 %v339, 0.0
    %v356 = vmax.f32 %v340, 0.0
    %v357 = vmax.f32 %v341, 0.0
    %v358 = vmax.f32 %v342, 0.0
    %v359 = vmax.f32 %v343, 0.0
    %v360 = vmax.f32 %v344, 0.0
    %v361 = vmax.f32 %v345, 0.0
    %v362 = vmax.f32 %v346, 0.0
    %v363 = vmax.f32 %v347, 0.0
    %v364 = vmax.f32 %v348, 0.0
    %v365 = vmax.f32 %v349, 0.0
    %v366 = vpack.c.bf16 %v351, %v350
    %v367 = vpack.c.bf16 %v353, %v352
    %v368 = vpack.c.bf16 %v355, %v354
    %v369 = vpack.c.bf16 %v357, %v356
    %v370 = vpack.c.bf16 %v359, %v358
    %v371 = vpack.c.bf16 %v361, %v360
    %v372 = vpack.c.bf16 %v363, %v362
    %v373 = vpack.c.bf16 %v365, %v364
    %v382 = vunpack.c.l.b16 %v366
    %v383 = vunpack.c.h.b16 %v366
    %v384 = vunpack.c.l.b16 %v367
    %v385 = vunpack.c.h.b16 %v367
    %v386 = vunpack.c.l.b16 %v368
    %v387 = vunpack.c.h.b16 %v368
    %v388 = vunpack.c.l.b16 %v369
    %v389 = vunpack.c.h.b16 %v369
    %v390 = vunpack.c.l.b16 %v370
    %v391 = vunpack.c.h.b16 %v370
    %v392 = vunpack.c.l.b16 %v371
    %v393 = vunpack.c.h.b16 %v371
    %v394 = vunpack.c.l.b16 %v372
    %v395 = vunpack.c.h.b16 %v372
    %v396 = vunpack.c.l.b16 %v373
    %v397 = vunpack.c.h.b16 %v373
    %v398 = vpack.c.b16 %v382, %v382
    %v399 = vpack.c.b16 %v383, %v383
    %v400 = vpack.c.b16 %v384, %v384
    %v401 = vpack.c.b16 %v385, %v385
    %v402 = vpack.c.b16 %v386, %v386
    %v403 = vpack.c.b16 %v387, %v387
    %v404 = vpack.c.b16 %v388, %v388
    %v405 = vpack.c.b16 %v389, %v389
    %v406 = vpack.c.b16 %v390, %v390
    %v407 = vpack.c.b16 %v391, %v391
    %v408 = vpack.c.b16 %v392, %v392
    %v409 = vpack.c.b16 %v393, %v393
    %v410 = vpack.c.b16 %v394, %v394
    %v411 = vpack.c.b16 %v395, %v395
    %v412 = vpack.c.b16 %v396, %v396
    %v413 = vpack.c.b16 %v397, %v397
    %430 = vst [vmem:[%s3] sm:$0xf] %v398
    %431 = vst [vmem:[%s3 + $0x4] sm:$0xf] %v399
    %432 = vst [vmem:[%s3 + $0x8] sm:$0xf] %v400
    %433 = vst [vmem:[%s3 + $0xc] sm:$0xf] %v401
    %434 = vst [vmem:[%s3 + $0x10] sm:$0xf] %v402
    %435 = vst [vmem:[%s3 + $0x14] sm:$0xf] %v403
    %436 = vst [vmem:[%s3 + $0x18] sm:$0xf] %v404
    %437 = vst [vmem:[%s3 + $0x1c] sm:$0xf] %v405
    %438 = vst [vmem:[%s3 + $0x20] sm:$0xf] %v406
    %439 = vst [vmem:[%s3 + $0x24] sm:$0xf] %v407
    %440 = vst [vmem:[%s3 + $0x28] sm:$0xf] %v408
    %441 = vst [vmem:[%s3 + $0x2c] sm:$0xf] %v409
    %442 = vst [vmem:[%s3 + $0x30] sm:$0xf] %v410
    %443 = vst [vmem:[%s3 + $0x34] sm:$0xf] %v411
    %444 = vst [vmem:[%s3 + $0x38] sm:$0xf] %v412
    %445 = vst [vmem:[%s3 + $0x3c] sm:$0xf] %v413
  $region21: #{gnn_forward.7} parent=0 // pred_fallthru
    _
  // Predicated region
  $region22: #{gnn_forward.7} parent=0 // pred_check
    _
  $region23: #{gnn_forward.7} parent=0 // pred_check_branch
    %447 = sbr.rel (0) target = $region25
  $region24: #{gnn_forward.7} parent=0 // pred_region
    _
  $region25: #{gnn_forward.7} parent=0 // pred_fallthru
    _
  // Predicated region
  $region26: #{gnn_forward.7} parent=0 // pred_check
    _
  $region27: #{gnn_forward.7} parent=0 // pred_check_branch
    %449 = sbr.rel (0) target = $region29
  $region28: #{gnn_forward.7} parent=0 // pred_region
    _
  $region29: #{gnn_forward.7} parent=0 // pred_fallthru
    _

</llo_original>
